<compile_context>
chip_gen: v7x
topology: tpu7x:2x2x1
jax: 0.10.0
libtpu: 0.0.40
codegen_flags: <defaults>
</compile_context>

<pallas_src>
import jax
import jax.numpy as jnp
from jax.experimental import pallas as pl
from jax.experimental.pallas import tpu as pltpu

B, S, H, FC, VOCAB = 2, 8, 768, 256, 100   # batch, seq, bert hidden, fc hidden, vocab
OUT_LANES = 128                            # lane-dense output slab; column 0 is the result


def simmod_kernel(pooled_ref, wp_ref, bp_ref, w1_ref, b1_ref, w2t_ref, b2_ref,
                  out_ref):
    # BERT pooler dense: tanh(pooled @ Wp + bp)   (bf16 weights, f32 accumulate)
    pooled_in = pooled_ref[...]                                  # (B, H) bf16
    pooled = jnp.tanh(
        jnp.dot(pooled_in, wp_ref[...], preferred_element_type=jnp.float32)
        + bp_ref[...])                                           # (B, H) f32

    # self.bert_drop = nn.Dropout(0.5): identity at inference time.

    # self.fc: Linear(768, 256) + ReLU
    h = jnp.dot(pooled.astype(jnp.bfloat16), w1_ref[...],
                preferred_element_type=jnp.float32) + b1_ref[...]
    h = jnp.maximum(h, 0.0)                                      # (B, FC)

    # self.f_out: Linear(256, 1) + Sigmoid, as a lane reduction
    # (avoids an N=1 MXU matmul and a (256,1) lane-padded VMEM tile).
    w2t = w2t_ref[...].astype(jnp.float32)                       # (1, FC)
    y = jnp.sum(h * w2t, axis=-1, keepdims=True) + b2_ref[0, 0]  # (B, 1)
    sig = jax.nn.sigmoid(y)
    # lane-dense (unmasked) store; wrapper slices column 0.
    out_ref[...] = jnp.broadcast_to(sig, out_ref.shape)


def similarity_head(pooled_bf16, params):
    wp, bp, w1, b1, w2t, b2 = params

    flops = 2 * B * (H * H + H * FC + FC)
    bytes_accessed = (pooled_bf16.size * 2
                      + wp.size * 2 + w1.size * 2 + w2t.size * 2
                      + (bp.size + b1.size + b2.size) * 4
                      + B * OUT_LANES * 4)

    out = pl.pallas_call(
        simmod_kernel,
        out_shape=jax.ShapeDtypeStruct((B, OUT_LANES), jnp.float32),
        grid_spec=pltpu.PrefetchScalarGridSpec(
            num_scalar_prefetch=0,
            grid=(1,),                                           # single step: no K-split
            in_specs=[
                pl.BlockSpec((B, H), lambda k: (0, 0)),          # pooled row (bf16)
                pl.BlockSpec((H, H), lambda k: (0, 0)),          # wp (bf16)
                pl.BlockSpec((1, H), lambda k: (0, 0)),          # bp
                pl.BlockSpec((H, FC), lambda k: (0, 0)),         # w1 (bf16)
                pl.BlockSpec((1, FC), lambda k: (0, 0)),         # b1
                pl.BlockSpec((1, FC), lambda k: (0, 0)),         # w2 transposed (bf16)
                pl.BlockSpec(memory_space=pltpu.MemorySpace.SMEM),  # b2 scalar
            ],
            out_specs=pl.BlockSpec((B, OUT_LANES), lambda k: (0, 0)),
        ),
        compiler_params=pltpu.CompilerParams(
            dimension_semantics=("arbitrary",)),
        cost_estimate=pl.CostEstimate(
            flops=flops,
            transcendentals=B * (H + 1),
            bytes_accessed=bytes_accessed),
    )(pooled_bf16, wp, bp, w1, b1, w2t, b2)
    return out[:, :1]                                            # (B, 1)


def reference_head(pooled_bf16, params):
    wp, bp, w1, b1, w2t, b2 = params
    pooled = jnp.tanh(pooled_bf16.astype(jnp.float32) @ wp.astype(jnp.float32) + bp)
    h = jnp.maximum(
        pooled.astype(jnp.bfloat16).astype(jnp.float32) @ w1.astype(jnp.float32) + b1,
        0.0)
    y = jnp.sum(h * w2t.astype(jnp.float32), axis=-1, keepdims=True) + b2
    return jax.nn.sigmoid(y)


def init_params(key):
    ks = jax.random.split(key, 7)
    # nn.Linear weights are (out, in) in PyTorch; store transposed as (in, out),
    # cast to bf16 (halves the dominant HBM traffic). Biases stay f32.
    wp = (jax.random.normal(ks[0], (H, H), jnp.float32) / jnp.sqrt(H)).astype(jnp.bfloat16)
    bp = jnp.zeros((1, H), jnp.float32)
    w1 = (jax.random.normal(ks[1], (H, FC), jnp.float32) / jnp.sqrt(H)).astype(jnp.bfloat16)
    b1 = jax.random.normal(ks[2], (1, FC), jnp.float32) * 0.01
    # f_out weight stored transposed (1, FC), lane-dense, bf16.
    w2t = (jax.random.normal(ks[3], (1, FC), jnp.float32) / jnp.sqrt(FC)).astype(jnp.bfloat16)
    b2 = jax.random.normal(ks[4], (1, 1), jnp.float32) * 0.01
    # deterministic embedding tables (BERT-encoder stand-in)
    word_emb = jax.random.normal(ks[5], (VOCAB, H), jnp.float32) * 0.02
    type_emb = jax.random.normal(ks[6], (2, H), jnp.float32) * 0.02
    pos_emb = jax.random.normal(jax.random.PRNGKey(42), (S, H), jnp.float32) * 0.02
    return (wp, bp, w1, b1, w2t, b2), (word_emb, type_emb, pos_emb)


if __name__ == "__main__":
    root = jax.random.PRNGKey(0)
    k_params, k_ids, _ = jax.random.split(root, 3)
    params, (word_emb, type_emb, pos_emb) = init_params(k_params)

    ids = jax.random.randint(k_ids, (B, S), 0, VOCAB)                 # (2, 8) int32
    token_type_ids = jnp.zeros((B, S), jnp.int32)
    lengths = jnp.array([S, S - 3], jnp.int32)                        # ragged mask
    mask = (jnp.arange(S)[None, :] < lengths[:, None]).astype(jnp.float32)  # (2, 8)

    # plain-JAX glue (BERT encoder stand-in): embedding lookup + masked-mean
    # pooling.  Both fuse into one small XLA op; the kernel only sees the
    # pooled (B, 768) bf16 row.
    emb = word_emb[ids] + type_emb[token_type_ids] + pos_emb[None, :, :]    # (B, S, H)
    cnt = jnp.maximum(jnp.sum(mask, axis=1, keepdims=True), 1.0)
    pooled_in = (jnp.sum(emb * mask[:, :, None], axis=1) / cnt).astype(jnp.bfloat16)

    out = similarity_head(pooled_in, params)
    out = jax.block_until_ready(out)

    ref = reference_head(pooled_in, params)
    assert out.shape == (B, 1)
    assert jnp.allclose(out, ref, atol=1e-3, rtol=1e-3), (out, ref)
    print("KERNEL_OK")
</pallas_src>

<mosaic_0001>
module attributes {stable_mosaic.version = 11 : i64} {
  func.func @simmod_kernel(%arg0: i32, %arg1: memref<2x768xbf16, #tpu.memory_space<vmem>>, %arg2: memref<768x768xbf16, #tpu.memory_space<vmem>>, %arg3: memref<1x768xf32, #tpu.memory_space<vmem>>, %arg4: memref<768x256xbf16, #tpu.memory_space<vmem>>, %arg5: memref<1x256xf32, #tpu.memory_space<vmem>>, %arg6: memref<1x256xbf16, #tpu.memory_space<vmem>>, %arg7: memref<1x1xf32, #tpu.memory_space<smem>>, %arg8: memref<2x128xf32, #tpu.memory_space<vmem>>) attributes {dimension_semantics = [#tpu.dimension_semantics<arbitrary>], iteration_bounds = array<i64: 1>, scalar_prefetch = 0 : i64, scratch_operands = 0 : i64, tpu.core_type = #tpu.core_type<tc>, window_params = [{pipeline_mode = #tpu.pipeline_mode<synchronous>, transform_indices = @transform_0, window_bounds = array<i64: 2, 768>}, {pipeline_mode = #tpu.pipeline_mode<synchronous>, transform_indices = @transform_1, window_bounds = array<i64: 768, 768>}, {pipeline_mode = #tpu.pipeline_mode<synchronous>, transform_indices = @transform_2, window_bounds = array<i64: 1, 768>}, {pipeline_mode = #tpu.pipeline_mode<synchronous>, transform_indices = @transform_3, window_bounds = array<i64: 768, 256>}, {pipeline_mode = #tpu.pipeline_mode<synchronous>, transform_indices = @transform_4, window_bounds = array<i64: 1, 256>}, {pipeline_mode = #tpu.pipeline_mode<synchronous>, transform_indices = @transform_5, window_bounds = array<i64: 1, 256>}, {transform_indices = @transform_6, window_bounds = array<i64: 1, 1>}, {pipeline_mode = #tpu.pipeline_mode<synchronous>, transform_indices = @transform_7, window_bounds = array<i64: 2, 128>}]} {
    %c0 = arith.constant 0 : index
    %c0_0 = arith.constant 0 : index
    %0 = vector.load %arg1[%c0, %c0_0] : memref<2x768xbf16, #tpu.memory_space<vmem>>, vector<2x768xbf16>
    %c0_1 = arith.constant 0 : index
    %c0_2 = arith.constant 0 : index
    %1 = vector.load %arg2[%c0_1, %c0_2] : memref<768x768xbf16, #tpu.memory_space<vmem>>, vector<768x768xbf16>
    %cst = arith.constant dense<0.000000e+00> : vector<2x768xf32>
    %2 = tpu.matmul %0, %1, %cst {dimension_numbers = #tpu.dot_dimension_numbers<[1], [0], [0], [1], [0, 0, 1, 1], [], []>} : vector<2x768xbf16>, vector<768x768xbf16>, vector<2x768xf32> -> vector<2x768xf32>
    %c0_3 = arith.constant 0 : index
    %c0_4 = arith.constant 0 : index
    %3 = vector.load %arg3[%c0_3, %c0_4] : memref<1x768xf32, #tpu.memory_space<vmem>>, vector<1x768xf32>
    %4 = vector.broadcast %3 : vector<1x768xf32> to vector<2x768xf32>
    %5 = arith.addf %2, %4 : vector<2x768xf32>
    %6 = math.tanh %5 : vector<2x768xf32>
    %7 = arith.truncf %6 : vector<2x768xf32> to vector<2x768xbf16>
    %c0_5 = arith.constant 0 : index
    %c0_6 = arith.constant 0 : index
    %8 = vector.load %arg4[%c0_5, %c0_6] : memref<768x256xbf16, #tpu.memory_space<vmem>>, vector<768x256xbf16>
    %cst_7 = arith.constant dense<0.000000e+00> : vector<2x256xf32>
    %9 = tpu.matmul %7, %8, %cst_7 {dimension_numbers = #tpu.dot_dimension_numbers<[1], [0], [0], [1], [0, 0, 1, 1], [], []>} : vector<2x768xbf16>, vector<768x256xbf16>, vector<2x256xf32> -> vector<2x256xf32>
    %c0_8 = arith.constant 0 : index
    %c0_9 = arith.constant 0 : index
    %10 = vector.load %arg5[%c0_8, %c0_9] : memref<1x256xf32, #tpu.memory_space<vmem>>, vector<1x256xf32>
    %11 = vector.broadcast %10 : vector<1x256xf32> to vector<2x256xf32>
    %12 = arith.addf %9, %11 : vector<2x256xf32>
    %cst_10 = arith.constant 0.000000e+00 : f32
    %13 = vector.broadcast %cst_10 : f32 to vector<2x256xf32>
    %14 = arith.maximumf %12, %13 : vector<2x256xf32>
    %c0_11 = arith.constant 0 : index
    %c0_12 = arith.constant 0 : index
    %15 = vector.load %arg6[%c0_11, %c0_12] : memref<1x256xbf16, #tpu.memory_space<vmem>>, vector<1x256xbf16>
    %16 = arith.extf %15 : vector<1x256xbf16> to vector<1x256xf32>
    %17 = vector.broadcast %16 : vector<1x256xf32> to vector<2x256xf32>
    %18 = arith.mulf %14, %17 : vector<2x256xf32>
    %cst_13 = arith.constant dense<0.000000e+00> : vector<2xf32>
    %19 = vector.multi_reduction <add>, %18, %cst_13 [1] : vector<2x256xf32> to vector<2xf32>
    %20 = vector.shape_cast %19 : vector<2xf32> to vector<2x1xf32>
    %c0_14 = arith.constant 0 : index
    %c0_15 = arith.constant 0 : index
    %21 = memref.load %arg7[%c0_14, %c0_15] : memref<1x1xf32, #tpu.memory_space<smem>>
    %22 = vector.broadcast %21 : f32 to vector<2x1xf32>
    %23 = arith.addf %20, %22 : vector<2x1xf32>
    %24 = arith.negf %23 : vector<2x1xf32>
    %25 = math.exp %24 : vector<2x1xf32>
    %cst_16 = arith.constant 1.000000e+00 : f32
    %26 = vector.broadcast %cst_16 : f32 to vector<2x1xf32>
    %27 = arith.addf %26, %25 : vector<2x1xf32>
    %28 = arith.divf %26, %27 : vector<2x1xf32>
    %29 = vector.shape_cast %28 : vector<2x1xf32> to vector<2x1xf32>
    %30 = vector.broadcast %29 : vector<2x1xf32> to vector<2x128xf32>
    %c0_17 = arith.constant 0 : index
    %c0_18 = arith.constant 0 : index
    %31 = vector.load %arg8[%c0_17, %c0_18] : memref<2x128xf32, #tpu.memory_space<vmem>>, vector<2x128xf32>
    tpu.vector_store %arg8[%c0_17, %c0_18], %30 {strides = array<i32>} : memref<2x128xf32, #tpu.memory_space<vmem>>, vector<2x128xf32>,
    return
  }
  func.func @transform_0(%arg0: i32) -> (i32, i32) {
    %c0_i32 = arith.constant 0 : i32
    %c0_i32_0 = arith.constant 0 : i32
    %c0_i32_1 = arith.constant 0 : i32
    return %c0_i32, %c0_i32_0 : i32, i32
  }
  func.func @transform_1(%arg0: i32) -> (i32, i32) {
    %c0_i32 = arith.constant 0 : i32
    %c0_i32_0 = arith.constant 0 : i32
    %c0_i32_1 = arith.constant 0 : i32
    return %c0_i32, %c0_i32_0 : i32, i32
  }
  func.func @transform_2(%arg0: i32) -> (i32, i32) {
    %c0_i32 = arith.constant 0 : i32
    %c0_i32_0 = arith.constant 0 : i32
    %c0_i32_1 = arith.constant 0 : i32
    return %c0_i32, %c0_i32_0 : i32, i32
  }
  func.func @transform_3(%arg0: i32) -> (i32, i32) {
    %c0_i32 = arith.constant 0 : i32
    %c0_i32_0 = arith.constant 0 : i32
    %c0_i32_1 = arith.constant 0 : i32
    return %c0_i32, %c0_i32_0 : i32, i32
  }
  func.func @transform_4(%arg0: i32) -> (i32, i32) {
    %c0_i32 = arith.constant 0 : i32
    %c0_i32_0 = arith.constant 0 : i32
    %c0_i32_1 = arith.constant 0 : i32
    return %c0_i32, %c0_i32_0 : i32, i32
  }
  func.func @transform_5(%arg0: i32) -> (i32, i32) {
    %c0_i32 = arith.constant 0 : i32
    %c0_i32_0 = arith.constant 0 : i32
    %c0_i32_1 = arith.constant 0 : i32
    return %c0_i32, %c0_i32_0 : i32, i32
  }
  func.func @transform_6(%arg0: i32) -> (i32, i32) {
    %c0_i32 = arith.constant 0 : i32
    %c0_i32_0 = arith.constant 0 : i32
    %c0_i32_1 = arith.constant 0 : i32
    return %c0_i32, %c0_i32_0 : i32, i32
  }
  func.func @transform_7(%arg0: i32) -> (i32, i32) {
    %c0_i32 = arith.constant 0 : i32
    %c0_i32_0 = arith.constant 0 : i32
    %c0_i32_1 = arith.constant 0 : i32
    return %c0_i32, %c0_i32_0 : i32, i32
  }
}

</mosaic_0001>

<llo_original>
// kernel: tpu_custom_call.1
$region0: #{tpu_custom_call.1}
  #allocation0 [shape = 'u32[]', space=smem, size = 0x4, offset = 0x4, fixed_abs, tag = 'smem constant byte address 0x4 - core index']
  #allocation1 [shape = 'u32[144,128]{1,0:T(1,128)}', space=vmem, size = 0x12000, scoped, tag = 'internal scratch']
  #allocation2 [shape = 'f32[1,1]{1,0:T(1,128)S(6)}', space=smem, size = 0x200, scoped, tag = 'scoped memory for tpu_custom_call.1']
  %s0 = inlined_call_operand.hbm [shape: bf16[2,768], index: 0, kind: input, shape index: {}]
  %s1 = inlined_call_operand.hbm [shape: bf16[768,768], index: 1, kind: input, shape index: {}]
  %s2 = inlined_call_operand.hbm [shape: f32[1,768], index: 2, kind: input, shape index: {}]
  %s3 = inlined_call_operand.hbm [shape: bf16[768,256], index: 3, kind: input, shape index: {}]
  %s4 = inlined_call_operand.hbm [shape: f32[1,256], index: 4, kind: input, shape index: {}]
  %s5 = inlined_call_operand.hbm [shape: bf16[1,256], index: 5, kind: input, shape index: {}]
  %s6 = inlined_call_operand.<no memory space> [shape: f32[1,1], index: 6, kind: input, shape index: {}]
  %s7 = inlined_call_operand.hbm [shape: f32[2,128], index: 7, kind: output, shape index: {}]
  %s8 = sld [smem:[#allocation0]]
  $region62: #{tpu_custom_call.1} parent=0
    _
  %s10 = ssub.s32 1, %s8
  %s11 = scalar_select 0, %s10, %s8
  %12 = sst [smem:[#allocation2]] %s6
  $region1: #{tpu_custom_call.1} parent=0
    #allocation3 [shape = 'u8[3072]{0}', space=vmem, size = 0xc00, scoped, tag = 'input window, operand 0, single buffered']
    #allocation4 [shape = 's32[1]{0}', space=sflag, size = 0x4, scoped, tag = 'scoped memory for tpu_custom_call.1']
    #allocation5 [shape = 's32[1]{0}', space=sflag, size = 0x4, scoped, tag = 'scoped memory for tpu_custom_call.1']
    #allocation6 [shape = 'u8[1179648]{0}', space=vmem, size = 0x120000, scoped, tag = 'input window, operand 1, single buffered']
    #allocation7 [shape = 's32[1]{0}', space=sflag, size = 0x4, scoped, tag = 'scoped memory for tpu_custom_call.1']
    #allocation8 [shape = 'u8[3072]{0}', space=vmem, size = 0xc00, scoped, tag = 'input window, operand 2, single buffered']
    #allocation9 [shape = 'u8[393216]{0}', space=vmem, size = 0x60000, scoped, tag = 'input window, operand 3, single buffered']
    #allocation10 [shape = 's32[1]{0}', space=sflag, size = 0x4, scoped, tag = 'scoped memory for tpu_custom_call.1']
    #allocation11 [shape = 'u8[1024]{0}', space=vmem, size = 0x400, scoped, tag = 'input window, operand 4, single buffered']
    #allocation12 [shape = 'u8[1024]{0}', space=vmem, size = 0x400, scoped, tag = 'input window, operand 5, single buffered']
    #allocation13 [shape = 's32[1]{0}', space=sflag, size = 0x4, scoped, tag = 'scoped memory for tpu_custom_call.1']
    #allocation14 [shape = 'u8[1024]{0}', space=vmem, size = 0x400, scoped, tag = 'output window, operand 0, single buffered']
    %13 = vsyncpa [#allocation4], 0
    %14 = vsyncpa [#allocation7], 0
    %15 = vsyncpa [#allocation10], 0
    %16 = vsyncpa [#allocation13], 0
    %17 = vsyncpa [#allocation5], 0
    // Predicated region
    $region2: #{tpu_custom_call.1} parent=1 // pred_check
      _
    $region3: #{tpu_custom_call.1} parent=1 // pred_check_branch
      %19 = sbr.rel (0) target = $region5
    $region4: #{tpu_custom_call.1} parent=1 // pred_region
      %s21 = ssub.s32 96, 96
      %22 = vsyncadd [#allocation4], %s21
      %s24 = sshll.u32 [#allocation3], 4
      %s25 = int_to_ptr.vmem [resolvable:$true] %s24
      %27 = dma.hbm_to_vmem [thread:$0]  %s0, 96, %s25, [#allocation4]
    $region5: #{tpu_custom_call.1} parent=1 // pred_fallthru
      _
    // Predicated region
    $region6: #{tpu_custom_call.1} parent=1 // pred_check
      _
    $region7: #{tpu_custom_call.1} parent=1 // pred_check_branch
      %29 = sbr.rel (0) target = $region9
    $region8: #{tpu_custom_call.1} parent=1 // pred_region
      %s31 = ssub.s32 36864, 36864
      %32 = vsyncadd [#allocation7], %s31
      %s33 = sshll.u32 [#allocation6], 4
      %s34 = int_to_ptr.vmem [resolvable:$true] %s33
      %39 = dma.hbm_to_vmem [thread:$0]  %s1, 36864, %s34, [#allocation7], 384, 384, 24
    $region9: #{tpu_custom_call.1} parent=1 // pred_fallthru
      _
    // Predicated region
    $region10: #{tpu_custom_call.1} parent=1 // pred_check
      _
    $region11: #{tpu_custom_call.1} parent=1 // pred_check_branch
      %41 = sbr.rel (0) target = $region13
    $region12: #{tpu_custom_call.1} parent=1 // pred_region
      %s43 = ssub.s32 96, 96
      %44 = vsyncadd [#allocation7], %s43
      %s46 = sshll.u32 [#allocation8], 4
      %s47 = int_to_ptr.vmem [resolvable:$true] %s46
      %49 = dma.hbm_to_vmem [thread:$0]  %s2, 96, %s47, [#allocation7]
    $region13: #{tpu_custom_call.1} parent=1 // pred_fallthru
      _
    // Predicated region
    $region14: #{tpu_custom_call.1} parent=1 // pred_check
      _
    $region15: #{tpu_custom_call.1} parent=1 // pred_check_branch
      %51 = sbr.rel (0) target = $region17
    $region16: #{tpu_custom_call.1} parent=1 // pred_region
      %s53 = ssub.s32 12288, 12288
      %54 = vsyncadd [#allocation10], %s53
      %s55 = sshll.u32 [#allocation9], 4
      %s56 = int_to_ptr.vmem [resolvable:$true] %s55
      %61 = dma.hbm_to_vmem [thread:$0]  %s3, 12288, %s56, [#allocation10], 128, 128, 8
    $region17: #{tpu_custom_call.1} parent=1 // pred_fallthru
      _
    // Predicated region
    $region18: #{tpu_custom_call.1} parent=1 // pred_check
      _
    $region19: #{tpu_custom_call.1} parent=1 // pred_check_branch
      %63 = sbr.rel (0) target = $region21
    $region20: #{tpu_custom_call.1} parent=1 // pred_region
      %s65 = ssub.s32 32, 32
      %66 = vsyncadd [#allocation10], %s65
      %s68 = sshll.u32 [#allocation11], 4
      %s69 = int_to_ptr.vmem [resolvable:$true] %s68
      %71 = dma.hbm_to_vmem [thread:$0]  %s4, 32, %s69, [#allocation10]
    $region21: #{tpu_custom_call.1} parent=1 // pred_fallthru
      _
    // Predicated region
    $region22: #{tpu_custom_call.1} parent=1 // pred_check
      _
    $region23: #{tpu_custom_call.1} parent=1 // pred_check_branch
      %73 = sbr.rel (0) target = $region25
    $region24: #{tpu_custom_call.1} parent=1 // pred_region
      %s75 = ssub.s32 32, 32
      %76 = vsyncadd [#allocation13], %s75
      %s78 = sshll.u32 [#allocation12], 4
      %s79 = int_to_ptr.vmem [resolvable:$true] %s78
      %81 = dma.hbm_to_vmem [thread:$0]  %s5, 32, %s79, [#allocation13]
    $region25: #{tpu_custom_call.1} parent=1 // pred_fallthru
      _
    // Predicated region
    $region26: #{tpu_custom_call.1} parent=1 // pred_check
      _
    $region27: #{tpu_custom_call.1} parent=1 // pred_check_branch
      %83 = sbr.rel (0) target = $region29
    $region28: #{tpu_custom_call.1} parent=1 // pred_region
      _
    $region29: #{tpu_custom_call.1} parent=1 // pred_fallthru
      _
    // Predicated region
    $region30: #{tpu_custom_call.1} parent=1 // pred_check
      _
    $region31: #{tpu_custom_call.1} parent=1 // pred_check_branch
      %85 = sbr.rel (0) target = $region33
    $region32: #{tpu_custom_call.1} parent=1 // pred_region
      %86 = dma.done [#allocation4], 96
    $region33: #{tpu_custom_call.1} parent=1 // pred_fallthru
      _
    // Predicated region
    $region34: #{tpu_custom_call.1} parent=1 // pred_check
      _
    $region35: #{tpu_custom_call.1} parent=1 // pred_check_branch
      %88 = sbr.rel (0) target = $region37
    $region36: #{tpu_custom_call.1} parent=1 // pred_region
      %89 = dma.done [#allocation7], 36864
    $region37: #{tpu_custom_call.1} parent=1 // pred_fallthru
      _
    // Predicated region
    $region38: #{tpu_custom_call.1} parent=1 // pred_check
      _
    $region39: #{tpu_custom_call.1} parent=1 // pred_check_branch
      %91 = sbr.rel (0) target = $region41
    $region40: #{tpu_custom_call.1} parent=1 // pred_region
      %92 = dma.done [#allocation7], 96
    $region41: #{tpu_custom_call.1} parent=1 // pred_fallthru
      _
    // Predicated region
    $region42: #{tpu_custom_call.1} parent=1 // pred_check
      _
    $region43: #{tpu_custom_call.1} parent=1 // pred_check_branch
      %94 = sbr.rel (0) target = $region45
    $region44: #{tpu_custom_call.1} parent=1 // pred_region
      %95 = dma.done [#allocation10], 12288
    $region45: #{tpu_custom_call.1} parent=1 // pred_fallthru
      _
    // Predicated region
    $region46: #{tpu_custom_call.1} parent=1 // pred_check
      _
    $region47: #{tpu_custom_call.1} parent=1 // pred_check_branch
      %97 = sbr.rel (0) target = $region49
    $region48: #{tpu_custom_call.1} parent=1 // pred_region
      %98 = dma.done [#allocation10], 32
    $region49: #{tpu_custom_call.1} parent=1 // pred_fallthru
      _
    // Predicated region
    $region50: #{tpu_custom_call.1} parent=1 // pred_check
      _
    $region51: #{tpu_custom_call.1} parent=1 // pred_check_branch
      %100 = sbr.rel (0) target = $region53
    $region52: #{tpu_custom_call.1} parent=1 // pred_region
      %101 = dma.done [#allocation13], 32
    $region53: #{tpu_custom_call.1} parent=1 // pred_fallthru
      _
    %v102 = vld [vmem:[#allocation3] sm:$0x3f]
    %v103 = vld [vmem:[#allocation6] sm:$0xff]
    %v104 = vld [vmem:[#allocation6 + $0x8] sm:$0xff]
    %v105 = vld [vmem:[#allocation6 + $0x10] sm:$0xff]
    %v106 = vld [vmem:[#allocation6 + $0x18] sm:$0xff]
    %v107 = vld [vmem:[#allocation6 + $0x20] sm:$0xff]
    %v108 = vld [vmem:[#allocation6 + $0x28] sm:$0xff]
    %v109 = vld [vmem:[#allocation6 + $0x30] sm:$0xff]
    %v110 = vld [vmem:[#allocation6 + $0x38] sm:$0xff]
    %v111 = vld [vmem:[#allocation6 + $0x40] sm:$0xff]
    %v112 = vld [vmem:[#allocation6 + $0x48] sm:$0xff]
    %v113 = vld [vmem:[#allocation6 + $0x50] sm:$0xff]
    %v114 = vld [vmem:[#allocation6 + $0x58] sm:$0xff]
    %v115 = vld [vmem:[#allocation6 + $0x60] sm:$0xff]
    %v116 = vld [vmem:[#allocation6 + $0x68] sm:$0xff]
    %v117 = vld [vmem:[#allocation6 + $0x70] sm:$0xff]
    %v118 = vld [vmem:[#allocation6 + $0x78] sm:$0xff]
    %v119 = vld [vmem:[#allocation6 + $0x80] sm:$0xff]
    %v120 = vld [vmem:[#allocation6 + $0x88] sm:$0xff]
    %v121 = vld [vmem:[#allocation6 + $0x90] sm:$0xff]
    %v122 = vld [vmem:[#allocation6 + $0x98] sm:$0xff]
    %v123 = vld [vmem:[#allocation6 + $0xa0] sm:$0xff]
    %v124 = vld [vmem:[#allocation6 + $0xa8] sm:$0xff]
    %v125 = vld [vmem:[#allocation6 + $0xb0] sm:$0xff]
    %v126 = vld [vmem:[#allocation6 + $0xb8] sm:$0xff]
    %v127 = vld [vmem:[#allocation6 + $0xc0] sm:$0xff]
    %v128 = vld [vmem:[#allocation6 + $0xc8] sm:$0xff]
    %v129 = vld [vmem:[#allocation6 + $0xd0] sm:$0xff]
    %v130 = vld [vmem:[#allocation6 + $0xd8] sm:$0xff]
    %v131 = vld [vmem:[#allocation6 + $0xe0] sm:$0xff]
    %v132 = vld [vmem:[#allocation6 + $0xe8] sm:$0xff]
    %v133 = vld [vmem:[#allocation6 + $0xf0] sm:$0xff]
    %v134 = vld [vmem:[#allocation6 + $0xf8] sm:$0xff]
    %v135 = vld [vmem:[#allocation6 + $0x100] sm:$0xff]
    %v136 = vld [vmem:[#allocation6 + $0x108] sm:$0xff]
    %v137 = vld [vmem:[#allocation6 + $0x110] sm:$0xff]
    %v138 = vld [vmem:[#allocation6 + $0x118] sm:$0xff]
    %v139 = vld [vmem:[#allocation6 + $0x120] sm:$0xff]
    %v140 = vld [vmem:[#allocation6 + $0x128] sm:$0xff]
    %v141 = vld [vmem:[#allocation6 + $0x130] sm:$0xff]
    %v142 = vld [vmem:[#allocation6 + $0x138] sm:$0xff]
    %v143 = vld [vmem:[#allocation6 + $0x140] sm:$0xff]
    %v144 = vld [vmem:[#allocation6 + $0x148] sm:$0xff]
    %v145 = vld [vmem:[#allocation6 + $0x150] sm:$0xff]
    %v146 = vld [vmem:[#allocation6 + $0x158] sm:$0xff]
    %v147 = vld [vmem:[#allocation6 + $0x160] sm:$0xff]
    %v148 = vld [vmem:[#allocation6 + $0x168] sm:$0xff]
    %v149 = vld [vmem:[#allocation6 + $0x170] sm:$0xff]
    %v150 = vld [vmem:[#allocation6 + $0x178] sm:$0xff]
    %v151 = vld [vmem:[#allocation6 + $0x180] sm:$0xff]
    %v152 = vld [vmem:[#allocation6 + $0x188] sm:$0xff]
    %v153 = vld [vmem:[#allocation6 + $0x190] sm:$0xff]
    %v154 = vld [vmem:[#allocation6 + $0x198] sm:$0xff]
    %v155 = vld [vmem:[#allocation6 + $0x1a0] sm:$0xff]
    %v156 = vld [vmem:[#allocation6 + $0x1a8] sm:$0xff]
    %v157 = vld [vmem:[#allocation6 + $0x1b0] sm:$0xff]
    %v158 = vld [vmem:[#allocation6 + $0x1b8] sm:$0xff]
    %v159 = vld [vmem:[#allocation6 + $0x1c0] sm:$0xff]
    %v160 = vld [vmem:[#allocation6 + $0x1c8] sm:$0xff]
    %v161 = vld [vmem:[#allocation6 + $0x1d0] sm:$0xff]
    %v162 = vld [vmem:[#allocation6 + $0x1d8] sm:$0xff]
    %v163 = vld [vmem:[#allocation6 + $0x1e0] sm:$0xff]
    %v164 = vld [vmem:[#allocation6 + $0x1e8] sm:$0xff]
    %v165 = vld [vmem:[#allocation6 + $0x1f0] sm:$0xff]
    %v166 = vld [vmem:[#allocation6 + $0x1f8] sm:$0xff]
    %v167 = vld [vmem:[#allocation6 + $0x200] sm:$0xff]
    %v168 = vld [vmem:[#allocation6 + $0x208] sm:$0xff]
    %v169 = vld [vmem:[#allocation6 + $0x210] sm:$0xff]
    %v170 = vld [vmem:[#allocation6 + $0x218] sm:$0xff]
    %v171 = vld [vmem:[#allocation6 + $0x220] sm:$0xff]
    %v172 = vld [vmem:[#allocation6 + $0x228] sm:$0xff]
    %v173 = vld [vmem:[#allocation6 + $0x230] sm:$0xff]
    %v174 = vld [vmem:[#allocation6 + $0x238] sm:$0xff]
    %v175 = vld [vmem:[#allocation6 + $0x240] sm:$0xff]
    %v176 = vld [vmem:[#allocation6 + $0x248] sm:$0xff]
    %v177 = vld [vmem:[#allocation6 + $0x250] sm:$0xff]
    %v178 = vld [vmem:[#allocation6 + $0x258] sm:$0xff]
    %v179 = vld [vmem:[#allocation6 + $0x260] sm:$0xff]
    %v180 = vld [vmem:[#allocation6 + $0x268] sm:$0xff]
    %v181 = vld [vmem:[#allocation6 + $0x270] sm:$0xff]
    %v182 = vld [vmem:[#allocation6 + $0x278] sm:$0xff]
    %v183 = vld [vmem:[#allocation6 + $0x280] sm:$0xff]
    %v184 = vld [vmem:[#allocation6 + $0x288] sm:$0xff]
    %v185 = vld [vmem:[#allocation6 + $0x290] sm:$0xff]
    %v186 = vld [vmem:[#allocation6 + $0x298] sm:$0xff]
    %v187 = vld [vmem:[#allocation6 + $0x2a0] sm:$0xff]
    %v188 = vld [vmem:[#allocation6 + $0x2a8] sm:$0xff]
    %v189 = vld [vmem:[#allocation6 + $0x2b0] sm:$0xff]
    %v190 = vld [vmem:[#allocation6 + $0x2b8] sm:$0xff]
    %v191 = vld [vmem:[#allocation6 + $0x2c0] sm:$0xff]
    %v192 = vld [vmem:[#allocation6 + $0x2c8] sm:$0xff]
    %v193 = vld [vmem:[#allocation6 + $0x2d0] sm:$0xff]
    %v194 = vld [vmem:[#allocation6 + $0x2d8] sm:$0xff]
    %v195 = vld [vmem:[#allocation6 + $0x2e0] sm:$0xff]
    %v196 = vld [vmem:[#allocation6 + $0x2e8] sm:$0xff]
    %v197 = vld [vmem:[#allocation6 + $0x2f0] sm:$0xff]
    %v198 = vld [vmem:[#allocation6 + $0x2f8] sm:$0xff]
    %v199 = vld [vmem:[#allocation6 + $0x300] sm:$0xff]
    %v200 = vld [vmem:[#allocation6 + $0x308] sm:$0xff]
    %v201 = vld [vmem:[#allocation6 + $0x310] sm:$0xff]
    %v202 = vld [vmem:[#allocation6 + $0x318] sm:$0xff]
    %v203 = vld [vmem:[#allocation6 + $0x320] sm:$0xff]
    %v204 = vld [vmem:[#allocation6 + $0x328] sm:$0xff]
    %v205 = vld [vmem:[#allocation6 + $0x330] sm:$0xff]
    %v206 = vld [vmem:[#allocation6 + $0x338] sm:$0xff]
    %v207 = vld [vmem:[#allocation6 + $0x340] sm:$0xff]
    %v208 = vld [vmem:[#allocation6 + $0x348] sm:$0xff]
    %v209 = vld [vmem:[#allocation6 + $0x350] sm:$0xff]
    %v210 = vld [vmem:[#allocation6 + $0x358] sm:$0xff]
    %v211 = vld [vmem:[#allocation6 + $0x360] sm:$0xff]
    %v212 = vld [vmem:[#allocation6 + $0x368] sm:$0xff]
    %v213 = vld [vmem:[#allocation6 + $0x370] sm:$0xff]
    %v214 = vld [vmem:[#allocation6 + $0x378] sm:$0xff]
    %v215 = vld [vmem:[#allocation6 + $0x380] sm:$0xff]
    %v216 = vld [vmem:[#allocation6 + $0x388] sm:$0xff]
    %v217 = vld [vmem:[#allocation6 + $0x390] sm:$0xff]
    %v218 = vld [vmem:[#allocation6 + $0x398] sm:$0xff]
    %v219 = vld [vmem:[#allocation6 + $0x3a0] sm:$0xff]
    %v220 = vld [vmem:[#allocation6 + $0x3a8] sm:$0xff]
    %v221 = vld [vmem:[#allocation6 + $0x3b0] sm:$0xff]
    %v222 = vld [vmem:[#allocation6 + $0x3b8] sm:$0xff]
    %v223 = vld [vmem:[#allocation6 + $0x3c0] sm:$0xff]
    %v224 = vld [vmem:[#allocation6 + $0x3c8] sm:$0xff]
    %v225 = vld [vmem:[#allocation6 + $0x3d0] sm:$0xff]
    %v226 = vld [vmem:[#allocation6 + $0x3d8] sm:$0xff]
    %v227 = vld [vmem:[#allocation6 + $0x3e0] sm:$0xff]
    %v228 = vld [vmem:[#allocation6 + $0x3e8] sm:$0xff]
    %v229 = vld [vmem:[#allocation6 + $0x3f0] sm:$0xff]
    %v230 = vld [vmem:[#allocation6 + $0x3f8] sm:$0xff]
    %v231 = vld [vmem:[#allocation6 + $0x400] sm:$0xff]
    %v232 = vld [vmem:[#allocation6 + $0x408] sm:$0xff]
    %v233 = vld [vmem:[#allocation6 + $0x410] sm:$0xff]
    %v234 = vld [vmem:[#allocation6 + $0x418] sm:$0xff]
    %v235 = vld [vmem:[#allocation6 + $0x420] sm:$0xff]
    %v236 = vld [vmem:[#allocation6 + $0x428] sm:$0xff]
    %v237 = vld [vmem:[#allocation6 + $0x430] sm:$0xff]
    %v238 = vld [vmem:[#allocation6 + $0x438] sm:$0xff]
    %v239 = vld [vmem:[#allocation6 + $0x440] sm:$0xff]
    %v240 = vld [vmem:[#allocation6 + $0x448] sm:$0xff]
    %v241 = vld [vmem:[#allocation6 + $0x450] sm:$0xff]
    %v242 = vld [vmem:[#allocation6 + $0x458] sm:$0xff]
    %v243 = vld [vmem:[#allocation6 + $0x460] sm:$0xff]
    %v244 = vld [vmem:[#allocation6 + $0x468] sm:$0xff]
    %v245 = vld [vmem:[#allocation6 + $0x470] sm:$0xff]
    %v246 = vld [vmem:[#allocation6 + $0x478] sm:$0xff]
    %v247 = vld [vmem:[#allocation6 + $0x480] sm:$0xff]
    %v248 = vld [vmem:[#allocation6 + $0x488] sm:$0xff]
    %v249 = vld [vmem:[#allocation6 + $0x490] sm:$0xff]
    %v250 = vld [vmem:[#allocation6 + $0x498] sm:$0xff]
    %v251 = vld [vmem:[#allocation6 + $0x4a0] sm:$0xff]
    %v252 = vld [vmem:[#allocation6 + $0x4a8] sm:$0xff]
    %v253 = vld [vmem:[#allocation6 + $0x4b0] sm:$0xff]
    %v254 = vld [vmem:[#allocation6 + $0x4b8] sm:$0xff]
    %v255 = vld [vmem:[#allocation6 + $0x4c0] sm:$0xff]
    %v256 = vld [vmem:[#allocation6 + $0x4c8] sm:$0xff]
    %v257 = vld [vmem:[#allocation6 + $0x4d0] sm:$0xff]
    %v258 = vld [vmem:[#allocation6 + $0x4d8] sm:$0xff]
    %v259 = vld [vmem:[#allocation6 + $0x4e0] sm:$0xff]
    %v260 = vld [vmem:[#allocation6 + $0x4e8] sm:$0xff]
    %v261 = vld [vmem:[#allocation6 + $0x4f0] sm:$0xff]
    %v262 = vld [vmem:[#allocation6 + $0x4f8] sm:$0xff]
    %v263 = vld [vmem:[#allocation6 + $0x500] sm:$0xff]
    %v264 = vld [vmem:[#allocation6 + $0x508] sm:$0xff]
    %v265 = vld [vmem:[#allocation6 + $0x510] sm:$0xff]
    %v266 = vld [vmem:[#allocation6 + $0x518] sm:$0xff]
    %v267 = vld [vmem:[#allocation6 + $0x520] sm:$0xff]
    %v268 = vld [vmem:[#allocation6 + $0x528] sm:$0xff]
    %v269 = vld [vmem:[#allocation6 + $0x530] sm:$0xff]
    %v270 = vld [vmem:[#allocation6 + $0x538] sm:$0xff]
    %v271 = vld [vmem:[#allocation6 + $0x540] sm:$0xff]
    %v272 = vld [vmem:[#allocation6 + $0x548] sm:$0xff]
    %v273 = vld [vmem:[#allocation6 + $0x550] sm:$0xff]
    %v274 = vld [vmem:[#allocation6 + $0x558] sm:$0xff]
    %v275 = vld [vmem:[#allocation6 + $0x560] sm:$0xff]
    %v276 = vld [vmem:[#allocation6 + $0x568] sm:$0xff]
    %v277 = vld [vmem:[#allocation6 + $0x570] sm:$0xff]
    %v278 = vld [vmem:[#allocation6 + $0x578] sm:$0xff]
    %v279 = vld [vmem:[#allocation6 + $0x580] sm:$0xff]
    %v280 = vld [vmem:[#allocation6 + $0x588] sm:$0xff]
    %v281 = vld [vmem:[#allocation6 + $0x590] sm:$0xff]
    %v282 = vld [vmem:[#allocation6 + $0x598] sm:$0xff]
    %v283 = vld [vmem:[#allocation6 + $0x5a0] sm:$0xff]
    %v284 = vld [vmem:[#allocation6 + $0x5a8] sm:$0xff]
    %v285 = vld [vmem:[#allocation6 + $0x5b0] sm:$0xff]
    %v286 = vld [vmem:[#allocation6 + $0x5b8] sm:$0xff]
    %v287 = vld [vmem:[#allocation6 + $0x5c0] sm:$0xff]
    %v288 = vld [vmem:[#allocation6 + $0x5c8] sm:$0xff]
    %v289 = vld [vmem:[#allocation6 + $0x5d0] sm:$0xff]
    %v290 = vld [vmem:[#allocation6 + $0x5d8] sm:$0xff]
    %v291 = vld [vmem:[#allocation6 + $0x5e0] sm:$0xff]
    %v292 = vld [vmem:[#allocation6 + $0x5e8] sm:$0xff]
    %v293 = vld [vmem:[#allocation6 + $0x5f0] sm:$0xff]
    %v294 = vld [vmem:[#allocation6 + $0x5f8] sm:$0xff]
    %v295 = vld [vmem:[#allocation6 + $0x600] sm:$0xff]
    %v296 = vld [vmem:[#allocation6 + $0x608] sm:$0xff]
    %v297 = vld [vmem:[#allocation6 + $0x610] sm:$0xff]
    %v298 = vld [vmem:[#allocation6 + $0x618] sm:$0xff]
    %v299 = vld [vmem:[#allocation6 + $0x620] sm:$0xff]
    %v300 = vld [vmem:[#allocation6 + $0x628] sm:$0xff]
    %v301 = vld [vmem:[#allocation6 + $0x630] sm:$0xff]
    %v302 = vld [vmem:[#allocation6 + $0x638] sm:$0xff]
    %v303 = vld [vmem:[#allocation6 + $0x640] sm:$0xff]
    %v304 = vld [vmem:[#allocation6 + $0x648] sm:$0xff]
    %v305 = vld [vmem:[#allocation6 + $0x650] sm:$0xff]
    %v306 = vld [vmem:[#allocation6 + $0x658] sm:$0xff]
    %v307 = vld [vmem:[#allocation6 + $0x660] sm:$0xff]
    %v308 = vld [vmem:[#allocation6 + $0x668] sm:$0xff]
    %v309 = vld [vmem:[#allocation6 + $0x670] sm:$0xff]
    %v310 = vld [vmem:[#allocation6 + $0x678] sm:$0xff]
    %v311 = vld [vmem:[#allocation6 + $0x680] sm:$0xff]
    %v312 = vld [vmem:[#allocation6 + $0x688] sm:$0xff]
    %v313 = vld [vmem:[#allocation6 + $0x690] sm:$0xff]
    %v314 = vld [vmem:[#allocation6 + $0x698] sm:$0xff]
    %v315 = vld [vmem:[#allocation6 + $0x6a0] sm:$0xff]
    %v316 = vld [vmem:[#allocation6 + $0x6a8] sm:$0xff]
    %v317 = vld [vmem:[#allocation6 + $0x6b0] sm:$0xff]
    %v318 = vld [vmem:[#allocation6 + $0x6b8] sm:$0xff]
    %v319 = vld [vmem:[#allocation6 + $0x6c0] sm:$0xff]
    %v320 = vld [vmem:[#allocation6 + $0x6c8] sm:$0xff]
    %v321 = vld [vmem:[#allocation6 + $0x6d0] sm:$0xff]
    %v322 = vld [vmem:[#allocation6 + $0x6d8] sm:$0xff]
    %v323 = vld [vmem:[#allocation6 + $0x6e0] sm:$0xff]
    %v324 = vld [vmem:[#allocation6 + $0x6e8] sm:$0xff]
    %v325 = vld [vmem:[#allocation6 + $0x6f0] sm:$0xff]
    %v326 = vld [vmem:[#allocation6 + $0x6f8] sm:$0xff]
    %v327 = vld [vmem:[#allocation6 + $0x700] sm:$0xff]
    %v328 = vld [vmem:[#allocation6 + $0x708] sm:$0xff]
    %v329 = vld [vmem:[#allocation6 + $0x710] sm:$0xff]
    %v330 = vld [vmem:[#allocation6 + $0x718] sm:$0xff]
    %v331 = vld [vmem:[#allocation6 + $0x720] sm:$0xff]
    %v332 = vld [vmem:[#allocation6 + $0x728] sm:$0xff]
    %v333 = vld [vmem:[#allocation6 + $0x730] sm:$0xff]
    %v334 = vld [vmem:[#allocation6 + $0x738] sm:$0xff]
    %v335 = vld [vmem:[#allocation6 + $0x740] sm:$0xff]
    %v336 = vld [vmem:[#allocation6 + $0x748] sm:$0xff]
    %v337 = vld [vmem:[#allocation6 + $0x750] sm:$0xff]
    %v338 = vld [vmem:[#allocation6 + $0x758] sm:$0xff]
    %v339 = vld [vmem:[#allocation6 + $0x760] sm:$0xff]
    %v340 = vld [vmem:[#allocation6 + $0x768] sm:$0xff]
    %v341 = vld [vmem:[#allocation6 + $0x770] sm:$0xff]
    %v342 = vld [vmem:[#allocation6 + $0x778] sm:$0xff]
    %v343 = vld [vmem:[#allocation6 + $0x780] sm:$0xff]
    %v344 = vld [vmem:[#allocation6 + $0x788] sm:$0xff]
    %v345 = vld [vmem:[#allocation6 + $0x790] sm:$0xff]
    %v346 = vld [vmem:[#allocation6 + $0x798] sm:$0xff]
    %v347 = vld [vmem:[#allocation6 + $0x7a0] sm:$0xff]
    %v348 = vld [vmem:[#allocation6 + $0x7a8] sm:$0xff]
    %v349 = vld [vmem:[#allocation6 + $0x7b0] sm:$0xff]
    %v350 = vld [vmem:[#allocation6 + $0x7b8] sm:$0xff]
    %v351 = vld [vmem:[#allocation6 + $0x7c0] sm:$0xff]
    %v352 = vld [vmem:[#allocation6 + $0x7c8] sm:$0xff]
    %v353 = vld [vmem:[#allocation6 + $0x7d0] sm:$0xff]
    %v354 = vld [vmem:[#allocation6 + $0x7d8] sm:$0xff]
    %v355 = vld [vmem:[#allocation6 + $0x7e0] sm:$0xff]
    %v356 = vld [vmem:[#allocation6 + $0x7e8] sm:$0xff]
    %v357 = vld [vmem:[#allocation6 + $0x7f0] sm:$0xff]
    %v358 = vld [vmem:[#allocation6 + $0x7f8] sm:$0xff]
    %v359 = vld [vmem:[#allocation6 + $0x800] sm:$0xff]
    %v360 = vld [vmem:[#allocation6 + $0x808] sm:$0xff]
    %v361 = vld [vmem:[#allocation6 + $0x810] sm:$0xff]
    %v362 = vld [vmem:[#allocation6 + $0x818] sm:$0xff]
    %v363 = vld [vmem:[#allocation6 + $0x820] sm:$0xff]
    %v364 = vld [vmem:[#allocation6 + $0x828] sm:$0xff]
    %v365 = vld [vmem:[#allocation6 + $0x830] sm:$0xff]
    %v366 = vld [vmem:[#allocation6 + $0x838] sm:$0xff]
    %v367 = vld [vmem:[#allocation6 + $0x840] sm:$0xff]
    %v368 = vld [vmem:[#allocation6 + $0x848] sm:$0xff]
    %v369 = vld [vmem:[#allocation6 + $0x850] sm:$0xff]
    %v370 = vld [vmem:[#allocation6 + $0x858] sm:$0xff]
    %v371 = vld [vmem:[#allocation6 + $0x860] sm:$0xff]
    %v372 = vld [vmem:[#allocation6 + $0x868] sm:$0xff]
    %v373 = vld [vmem:[#allocation6 + $0x870] sm:$0xff]
    %v374 = vld [vmem:[#allocation6 + $0x878] sm:$0xff]
    %v375 = vld [vmem:[#allocation6 + $0x880] sm:$0xff]
    %v376 = vld [vmem:[#allocation6 + $0x888] sm:$0xff]
    %v377 = vld [vmem:[#allocation6 + $0x890] sm:$0xff]
    %v378 = vld [vmem:[#allocation6 + $0x898] sm:$0xff]
    %v379 = vld [vmem:[#allocation6 + $0x8a0] sm:$0xff]
    %v380 = vld [vmem:[#allocation6 + $0x8a8] sm:$0xff]
    %v381 = vld [vmem:[#allocation6 + $0x8b0] sm:$0xff]
    %v382 = vld [vmem:[#allocation6 + $0x8b8] sm:$0xff]
    %v383 = vld [vmem:[#allocation6 + $0x8c0] sm:$0xff]
    %v384 = vld [vmem:[#allocation6 + $0x8c8] sm:$0xff]
    %v385 = vld [vmem:[#allocation6 + $0x8d0] sm:$0xff]
    %v386 = vld [vmem:[#allocation6 + $0x8d8] sm:$0xff]
    %v387 = vld [vmem:[#allocation6 + $0x8e0] sm:$0xff]
    %v388 = vld [vmem:[#allocation6 + $0x8e8] sm:$0xff]
    %v389 = vld [vmem:[#allocation6 + $0x8f0] sm:$0xff]
    %v390 = vld [vmem:[#allocation6 + $0x8f8] sm:$0xff]
    %v391 = vld [vmem:[#allocation8] sm:$0x3f]
    %v393 = vlaneseq
    %v394 = vshrl.u32 %v393, 7
    %v395 = vsub.s32 0, %v394
    %v396 = vrot.slane %v391, %v395
    %v397 = vlaneseq
    %v398 = vshrl.u32 %v397, 7
    %v399 = vsub.s32 1, %v398
    %v400 = vrot.slane %v391, %v399
    %v401 = vlaneseq
    %v402 = vshrl.u32 %v401, 7
    %v403 = vsub.s32 2, %v402
    %v404 = vrot.slane %v391, %v403
    %v405 = vlaneseq
    %v406 = vshrl.u32 %v405, 7
    %v407 = vsub.s32 3, %v406
    %v408 = vrot.slane %v391, %v407
    %v409 = vlaneseq
    %v410 = vshrl.u32 %v409, 7
    %v411 = vsub.s32 4, %v410
    %v412 = vrot.slane %v391, %v411
    %v413 = vlaneseq
    %v414 = vshrl.u32 %v413, 7
    %v415 = vsub.s32 5, %v414
    %v416 = vrot.slane %v391, %v415
    %v424 = vcombine.high %v102, %v102
    %v426 = vunpack.c.l.s4 1966171168
    %v427 = vunpack.c.0.s8 %v426
    %v428 = vlaneseq
    %v429 = vshrl.u32 %v428, 7
    %v430 = vsub.s32 %v427, %v429
    %v431 = vrot.slane %v102, %v430
    %v433 = vunpack.c.l.s4 1966171168
    %v434 = vunpack.c.0.s8 %v433
    %v435 = vlaneseq
    %v436 = vshrl.u32 %v435, 7
    %v437 = vsub.s32 %v434, %v436
    %v438 = vrot.slane %v424, %v437
    %v439 = vcombine.high %v431, %v431
    %v440 = vcombine.high %v438, %v438
    %v442 = vunpack.c.l.s4 1966171168
    %v443 = vunpack.c.0.s8 %v442
    %v444 = vlaneseq
    %v445 = vshrl.u32 %v444, 7
    %v446 = vsub.s32 %v443, %v445
    %v447 = vrot.slane %v431, %v446
    %v449 = vunpack.c.l.s4 1966171168
    %v450 = vunpack.c.0.s8 %v449
    %v451 = vlaneseq
    %v452 = vshrl.u32 %v451, 7
    %v453 = vsub.s32 %v450, %v452
    %v454 = vrot.slane %v438, %v453
    %v456 = vunpack.c.l.s4 1966171168
    %v457 = vunpack.c.0.s8 %v456
    %v458 = vlaneseq
    %v459 = vshrl.u32 %v458, 7
    %v460 = vsub.s32 %v457, %v459
    %v461 = vrot.slane %v439, %v460
    %v463 = vunpack.c.l.s4 1966171168
    %v464 = vunpack.c.0.s8 %v463
    %v465 = vlaneseq
    %v466 = vshrl.u32 %v465, 7
    %v467 = vsub.s32 %v464, %v466
    %v468 = vrot.slane %v440, %v467
    %v469 = vcombine.high %v447, %v447
    %v470 = vcombine.high %v461, %v461
    %v765 = vunpack.c.l.b16 %v103
    %v766 = vunpack.c.h.b16 %v103
    %v767 = vunpack.c.l.b16 %v104
    %v768 = vunpack.c.h.b16 %v104
    %v769 = vunpack.c.l.b16 %v105
    %v770 = vunpack.c.h.b16 %v105
    %v771 = vunpack.c.l.b16 %v106
    %v772 = vunpack.c.h.b16 %v106
    %v773 = vunpack.c.l.b16 %v107
    %v774 = vunpack.c.h.b16 %v107
    %v775 = vunpack.c.l.b16 %v108
    %v776 = vunpack.c.h.b16 %v108
    %v777 = vunpack.c.l.b16 %v109
    %v778 = vunpack.c.h.b16 %v109
    %v779 = vunpack.c.l.b16 %v110
    %v780 = vunpack.c.h.b16 %v110
    %v781 = vunpack.c.l.b16 %v111
    %v782 = vunpack.c.h.b16 %v111
    %v783 = vunpack.c.l.b16 %v112
    %v784 = vunpack.c.h.b16 %v112
    %v785 = vunpack.c.l.b16 %v113
    %v786 = vunpack.c.h.b16 %v113
    %v787 = vunpack.c.l.b16 %v114
    %v788 = vunpack.c.h.b16 %v114
    %v789 = vunpack.c.l.b16 %v115
    %v790 = vunpack.c.h.b16 %v115
    %v791 = vunpack.c.l.b16 %v116
    %v792 = vunpack.c.h.b16 %v116
    %v793 = vunpack.c.l.b16 %v117
    %v794 = vunpack.c.h.b16 %v117
    %v795 = vunpack.c.l.b16 %v118
    %v796 = vunpack.c.h.b16 %v118
    %v797 = vunpack.c.l.b16 %v119
    %v798 = vunpack.c.h.b16 %v119
    %v799 = vunpack.c.l.b16 %v120
    %v800 = vunpack.c.h.b16 %v120
    %v801 = vunpack.c.l.b16 %v121
    %v802 = vunpack.c.h.b16 %v121
    %v803 = vunpack.c.l.b16 %v122
    %v804 = vunpack.c.h.b16 %v122
    %v805 = vunpack.c.l.b16 %v123
    %v806 = vunpack.c.h.b16 %v123
    %v807 = vunpack.c.l.b16 %v124
    %v808 = vunpack.c.h.b16 %v124
    %v809 = vunpack.c.l.b16 %v125
    %v810 = vunpack.c.h.b16 %v125
    %v811 = vunpack.c.l.b16 %v126
    %v812 = vunpack.c.h.b16 %v126
    %v813 = vunpack.c.l.b16 %v127
    %v814 = vunpack.c.h.b16 %v127
    %v815 = vunpack.c.l.b16 %v128
    %v816 = vunpack.c.h.b16 %v128
    %v817 = vunpack.c.l.b16 %v129
    %v818 = vunpack.c.h.b16 %v129
    %v819 = vunpack.c.l.b16 %v130
    %v820 = vunpack.c.h.b16 %v130
    %v821 = vunpack.c.l.b16 %v131
    %v822 = vunpack.c.h.b16 %v131
    %v823 = vunpack.c.l.b16 %v132
    %v824 = vunpack.c.h.b16 %v132
    %v825 = vunpack.c.l.b16 %v133
    %v826 = vunpack.c.h.b16 %v133
    %v827 = vunpack.c.l.b16 %v134
    %v828 = vunpack.c.h.b16 %v134
    %v829 = vunpack.c.l.b16 %v135
    %v830 = vunpack.c.h.b16 %v135
    %v831 = vunpack.c.l.b16 %v136
    %v832 = vunpack.c.h.b16 %v136
    %v833 = vunpack.c.l.b16 %v137
    %v834 = vunpack.c.h.b16 %v137
    %v835 = vunpack.c.l.b16 %v138
    %v836 = vunpack.c.h.b16 %v138
    %v837 = vunpack.c.l.b16 %v139
    %v838 = vunpack.c.h.b16 %v139
    %v839 = vunpack.c.l.b16 %v140
    %v840 = vunpack.c.h.b16 %v140
    %v841 = vunpack.c.l.b16 %v141
    %v842 = vunpack.c.h.b16 %v141
    %v843 = vunpack.c.l.b16 %v142
    %v844 = vunpack.c.h.b16 %v142
    %v845 = vunpack.c.l.b16 %v143
    %v846 = vunpack.c.h.b16 %v143
    %v847 = vunpack.c.l.b16 %v144
    %v848 = vunpack.c.h.b16 %v144
    %v849 = vunpack.c.l.b16 %v145
    %v850 = vunpack.c.h.b16 %v145
    %v851 = vunpack.c.l.b16 %v146
    %v852 = vunpack.c.h.b16 %v146
    %v853 = vunpack.c.l.b16 %v147
    %v854 = vunpack.c.h.b16 %v147
    %v855 = vunpack.c.l.b16 %v148
    %v856 = vunpack.c.h.b16 %v148
    %v857 = vunpack.c.l.b16 %v149
    %v858 = vunpack.c.h.b16 %v149
    %v859 = vunpack.c.l.b16 %v150
    %v860 = vunpack.c.h.b16 %v150
    %v861 = vunpack.c.l.b16 %v151
    %v862 = vunpack.c.h.b16 %v151
    %v863 = vunpack.c.l.b16 %v152
    %v864 = vunpack.c.h.b16 %v152
    %v865 = vunpack.c.l.b16 %v153
    %v866 = vunpack.c.h.b16 %v153
    %v867 = vunpack.c.l.b16 %v154
    %v868 = vunpack.c.h.b16 %v154
    %v869 = vunpack.c.l.b16 %v155
    %v870 = vunpack.c.h.b16 %v155
    %v871 = vunpack.c.l.b16 %v156
    %v872 = vunpack.c.h.b16 %v156
    %v873 = vunpack.c.l.b16 %v157
    %v874 = vunpack.c.h.b16 %v157
    %v875 = vunpack.c.l.b16 %v158
    %v876 = vunpack.c.h.b16 %v158
    %v877 = vunpack.c.l.b16 %v159
    %v878 = vunpack.c.h.b16 %v159
    %v879 = vunpack.c.l.b16 %v160
    %v880 = vunpack.c.h.b16 %v160
    %v881 = vunpack.c.l.b16 %v161
    %v882 = vunpack.c.h.b16 %v161
    %v883 = vunpack.c.l.b16 %v162
    %v884 = vunpack.c.h.b16 %v162
    %v885 = vunpack.c.l.b16 %v163
    %v886 = vunpack.c.h.b16 %v163
    %v887 = vunpack.c.l.b16 %v164
    %v888 = vunpack.c.h.b16 %v164
    %v889 = vunpack.c.l.b16 %v165
    %v890 = vunpack.c.h.b16 %v165
    %v891 = vunpack.c.l.b16 %v166
    %v892 = vunpack.c.h.b16 %v166
    %v893 = vunpack.c.l.b16 %v167
    %v894 = vunpack.c.h.b16 %v167
    %v895 = vunpack.c.l.b16 %v168
    %v896 = vunpack.c.h.b16 %v168
    %v897 = vunpack.c.l.b16 %v169
    %v898 = vunpack.c.h.b16 %v169
    %v899 = vunpack.c.l.b16 %v170
    %v900 = vunpack.c.h.b16 %v170
    %v901 = vunpack.c.l.b16 %v171
    %v902 = vunpack.c.h.b16 %v171
    %v903 = vunpack.c.l.b16 %v172
    %v904 = vunpack.c.h.b16 %v172
    %v905 = vunpack.c.l.b16 %v173
    %v906 = vunpack.c.h.b16 %v173
    %v907 = vunpack.c.l.b16 %v174
    %v908 = vunpack.c.h.b16 %v174
    %v909 = vunpack.c.l.b16 %v175
    %v910 = vunpack.c.h.b16 %v175
    %v911 = vunpack.c.l.b16 %v176
    %v912 = vunpack.c.h.b16 %v176
    %v913 = vunpack.c.l.b16 %v177
    %v914 = vunpack.c.h.b16 %v177
    %v915 = vunpack.c.l.b16 %v178
    %v916 = vunpack.c.h.b16 %v178
    %v917 = vunpack.c.l.b16 %v179
    %v918 = vunpack.c.h.b16 %v179
    %v919 = vunpack.c.l.b16 %v180
    %v920 = vunpack.c.h.b16 %v180
    %v921 = vunpack.c.l.b16 %v181
    %v922 = vunpack.c.h.b16 %v181
    %v923 = vunpack.c.l.b16 %v182
    %v924 = vunpack.c.h.b16 %v182
    %v925 = vunpack.c.l.b16 %v183
    %v926 = vunpack.c.h.b16 %v183
    %v927 = vunpack.c.l.b16 %v184
    %v928 = vunpack.c.h.b16 %v184
    %v929 = vunpack.c.l.b16 %v185
    %v930 = vunpack.c.h.b16 %v185
    %v931 = vunpack.c.l.b16 %v186
    %v932 = vunpack.c.h.b16 %v186
    %v933 = vunpack.c.l.b16 %v187
    %v934 = vunpack.c.h.b16 %v187
    %v935 = vunpack.c.l.b16 %v188
    %v936 = vunpack.c.h.b16 %v188
    %v937 = vunpack.c.l.b16 %v189
    %v938 = vunpack.c.h.b16 %v189
    %v939 = vunpack.c.l.b16 %v190
    %v940 = vunpack.c.h.b16 %v190
    %v941 = vunpack.c.l.b16 %v191
    %v942 = vunpack.c.h.b16 %v191
    %v943 = vunpack.c.l.b16 %v192
    %v944 = vunpack.c.h.b16 %v192
    %v945 = vunpack.c.l.b16 %v193
    %v946 = vunpack.c.h.b16 %v193
    %v947 = vunpack.c.l.b16 %v194
    %v948 = vunpack.c.h.b16 %v194
    %v949 = vunpack.c.l.b16 %v195
    %v950 = vunpack.c.h.b16 %v195
    %v951 = vunpack.c.l.b16 %v196
    %v952 = vunpack.c.h.b16 %v196
    %v953 = vunpack.c.l.b16 %v197
    %v954 = vunpack.c.h.b16 %v197
    %v955 = vunpack.c.l.b16 %v198
    %v956 = vunpack.c.h.b16 %v198
    %v957 = vunpack.c.l.b16 %v199
    %v958 = vunpack.c.h.b16 %v199
    %v959 = vunpack.c.l.b16 %v200
    %v960 = vunpack.c.h.b16 %v200
    %v961 = vunpack.c.l.b16 %v201
    %v962 = vunpack.c.h.b16 %v201
    %v963 = vunpack.c.l.b16 %v202
    %v964 = vunpack.c.h.b16 %v202
    %v965 = vunpack.c.l.b16 %v203
    %v966 = vunpack.c.h.b16 %v203
    %v967 = vunpack.c.l.b16 %v204
    %v968 = vunpack.c.h.b16 %v204
    %v969 = vunpack.c.l.b16 %v205
    %v970 = vunpack.c.h.b16 %v205
    %v971 = vunpack.c.l.b16 %v206
    %v972 = vunpack.c.h.b16 %v206
    %v973 = vunpack.c.l.b16 %v207
    %v974 = vunpack.c.h.b16 %v207
    %v975 = vunpack.c.l.b16 %v208
    %v976 = vunpack.c.h.b16 %v208
    %v977 = vunpack.c.l.b16 %v209
    %v978 = vunpack.c.h.b16 %v209
    %v979 = vunpack.c.l.b16 %v210
    %v980 = vunpack.c.h.b16 %v210
    %v981 = vunpack.c.l.b16 %v211
    %v982 = vunpack.c.h.b16 %v211
    %v983 = vunpack.c.l.b16 %v212
    %v984 = vunpack.c.h.b16 %v212
    %v985 = vunpack.c.l.b16 %v213
    %v986 = vunpack.c.h.b16 %v213
    %v987 = vunpack.c.l.b16 %v214
    %v988 = vunpack.c.h.b16 %v214
    %v989 = vunpack.c.l.b16 %v215
    %v990 = vunpack.c.h.b16 %v215
    %v991 = vunpack.c.l.b16 %v216
    %v992 = vunpack.c.h.b16 %v216
    %v993 = vunpack.c.l.b16 %v217
    %v994 = vunpack.c.h.b16 %v217
    %v995 = vunpack.c.l.b16 %v218
    %v996 = vunpack.c.h.b16 %v218
    %v997 = vunpack.c.l.b16 %v219
    %v998 = vunpack.c.h.b16 %v219
    %v999 = vunpack.c.l.b16 %v220
    %v1000 = vunpack.c.h.b16 %v220
    %v1001 = vunpack.c.l.b16 %v221
    %v1002 = vunpack.c.h.b16 %v221
    %v1003 = vunpack.c.l.b16 %v222
    %v1004 = vunpack.c.h.b16 %v222
    %v1005 = vunpack.c.l.b16 %v223
    %v1006 = vunpack.c.h.b16 %v223
    %v1007 = vunpack.c.l.b16 %v224
    %v1008 = vunpack.c.h.b16 %v224
    %v1009 = vunpack.c.l.b16 %v225
    %v1010 = vunpack.c.h.b16 %v225
    %v1011 = vunpack.c.l.b16 %v226
    %v1012 = vunpack.c.h.b16 %v226
    %v1013 = vunpack.c.l.b16 %v227
    %v1014 = vunpack.c.h.b16 %v227
    %v1015 = vunpack.c.l.b16 %v228
    %v1016 = vunpack.c.h.b16 %v228
    %v1017 = vunpack.c.l.b16 %v229
    %v1018 = vunpack.c.h.b16 %v229
    %v1019 = vunpack.c.l.b16 %v230
    %v1020 = vunpack.c.h.b16 %v230
    %v1021 = vunpack.c.l.b16 %v231
    %v1022 = vunpack.c.h.b16 %v231
    %v1023 = vunpack.c.l.b16 %v232
    %v1024 = vunpack.c.h.b16 %v232
    %v1025 = vunpack.c.l.b16 %v233
    %v1026 = vunpack.c.h.b16 %v233
    %v1027 = vunpack.c.l.b16 %v234
    %v1028 = vunpack.c.h.b16 %v234
    %v1029 = vunpack.c.l.b16 %v235
    %v1030 = vunpack.c.h.b16 %v235
    %v1031 = vunpack.c.l.b16 %v236
    %v1032 = vunpack.c.h.b16 %v236
    %v1033 = vunpack.c.l.b16 %v237
    %v1034 = vunpack.c.h.b16 %v237
    %v1035 = vunpack.c.l.b16 %v238
    %v1036 = vunpack.c.h.b16 %v238
    %v1037 = vunpack.c.l.b16 %v239
    %v1038 = vunpack.c.h.b16 %v239
    %v1039 = vunpack.c.l.b16 %v240
    %v1040 = vunpack.c.h.b16 %v240
    %v1041 = vunpack.c.l.b16 %v241
    %v1042 = vunpack.c.h.b16 %v241
    %v1043 = vunpack.c.l.b16 %v242
    %v1044 = vunpack.c.h.b16 %v242
    %v1045 = vunpack.c.l.b16 %v243
    %v1046 = vunpack.c.h.b16 %v243
    %v1047 = vunpack.c.l.b16 %v244
    %v1048 = vunpack.c.h.b16 %v244
    %v1049 = vunpack.c.l.b16 %v245
    %v1050 = vunpack.c.h.b16 %v245
    %v1051 = vunpack.c.l.b16 %v246
    %v1052 = vunpack.c.h.b16 %v246
    %v1053 = vunpack.c.l.b16 %v247
    %v1054 = vunpack.c.h.b16 %v247
    %v1055 = vunpack.c.l.b16 %v248
    %v1056 = vunpack.c.h.b16 %v248
    %v1057 = vunpack.c.l.b16 %v249
    %v1058 = vunpack.c.h.b16 %v249
    %v1059 = vunpack.c.l.b16 %v250
    %v1060 = vunpack.c.h.b16 %v250
    %v1061 = vunpack.c.l.b16 %v251
    %v1062 = vunpack.c.h.b16 %v251
    %v1063 = vunpack.c.l.b16 %v252
    %v1064 = vunpack.c.h.b16 %v252
    %v1065 = vunpack.c.l.b16 %v253
    %v1066 = vunpack.c.h.b16 %v253
    %v1067 = vunpack.c.l.b16 %v254
    %v1068 = vunpack.c.h.b16 %v254
    %v1069 = vunpack.c.l.b16 %v255
    %v1070 = vunpack.c.h.b16 %v255
    %v1071 = vunpack.c.l.b16 %v256
    %v1072 = vunpack.c.h.b16 %v256
    %v1073 = vunpack.c.l.b16 %v257
    %v1074 = vunpack.c.h.b16 %v257
    %v1075 = vunpack.c.l.b16 %v258
    %v1076 = vunpack.c.h.b16 %v258
    %v1077 = vunpack.c.l.b16 %v259
    %v1078 = vunpack.c.h.b16 %v259
    %v1079 = vunpack.c.l.b16 %v260
    %v1080 = vunpack.c.h.b16 %v260
    %v1081 = vunpack.c.l.b16 %v261
    %v1082 = vunpack.c.h.b16 %v261
    %v1083 = vunpack.c.l.b16 %v262
    %v1084 = vunpack.c.h.b16 %v262
    %v1085 = vunpack.c.l.b16 %v263
    %v1086 = vunpack.c.h.b16 %v263
    %v1087 = vunpack.c.l.b16 %v264
    %v1088 = vunpack.c.h.b16 %v264
    %v1089 = vunpack.c.l.b16 %v265
    %v1090 = vunpack.c.h.b16 %v265
    %v1091 = vunpack.c.l.b16 %v266
    %v1092 = vunpack.c.h.b16 %v266
    %v1093 = vunpack.c.l.b16 %v267
    %v1094 = vunpack.c.h.b16 %v267
    %v1095 = vunpack.c.l.b16 %v268
    %v1096 = vunpack.c.h.b16 %v268
    %v1097 = vunpack.c.l.b16 %v269
    %v1098 = vunpack.c.h.b16 %v269
    %v1099 = vunpack.c.l.b16 %v270
    %v1100 = vunpack.c.h.b16 %v270
    %v1101 = vunpack.c.l.b16 %v271
    %v1102 = vunpack.c.h.b16 %v271
    %v1103 = vunpack.c.l.b16 %v272
    %v1104 = vunpack.c.h.b16 %v272
    %v1105 = vunpack.c.l.b16 %v273
    %v1106 = vunpack.c.h.b16 %v273
    %v1107 = vunpack.c.l.b16 %v274
    %v1108 = vunpack.c.h.b16 %v274
    %v1109 = vunpack.c.l.b16 %v275
    %v1110 = vunpack.c.h.b16 %v275
    %v1111 = vunpack.c.l.b16 %v276
    %v1112 = vunpack.c.h.b16 %v276
    %v1113 = vunpack.c.l.b16 %v277
    %v1114 = vunpack.c.h.b16 %v277
    %v1115 = vunpack.c.l.b16 %v278
    %v1116 = vunpack.c.h.b16 %v278
    %v1117 = vunpack.c.l.b16 %v279
    %v1118 = vunpack.c.h.b16 %v279
    %v1119 = vunpack.c.l.b16 %v280
    %v1120 = vunpack.c.h.b16 %v280
    %v1121 = vunpack.c.l.b16 %v281
    %v1122 = vunpack.c.h.b16 %v281
    %v1123 = vunpack.c.l.b16 %v282
    %v1124 = vunpack.c.h.b16 %v282
    %v1125 = vunpack.c.l.b16 %v283
    %v1126 = vunpack.c.h.b16 %v283
    %v1127 = vunpack.c.l.b16 %v284
    %v1128 = vunpack.c.h.b16 %v284
    %v1129 = vunpack.c.l.b16 %v285
    %v1130 = vunpack.c.h.b16 %v285
    %v1131 = vunpack.c.l.b16 %v286
    %v1132 = vunpack.c.h.b16 %v286
    %v1133 = vunpack.c.l.b16 %v287
    %v1134 = vunpack.c.h.b16 %v287
    %v1135 = vunpack.c.l.b16 %v288
    %v1136 = vunpack.c.h.b16 %v288
    %v1137 = vunpack.c.l.b16 %v289
    %v1138 = vunpack.c.h.b16 %v289
    %v1139 = vunpack.c.l.b16 %v290
    %v1140 = vunpack.c.h.b16 %v290
    %v1141 = vunpack.c.l.b16 %v291
    %v1142 = vunpack.c.h.b16 %v291
    %v1143 = vunpack.c.l.b16 %v292
    %v1144 = vunpack.c.h.b16 %v292
    %v1145 = vunpack.c.l.b16 %v293
    %v1146 = vunpack.c.h.b16 %v293
    %v1147 = vunpack.c.l.b16 %v294
    %v1148 = vunpack.c.h.b16 %v294
    %v1149 = vunpack.c.l.b16 %v295
    %v1150 = vunpack.c.h.b16 %v295
    %v1151 = vunpack.c.l.b16 %v296
    %v1152 = vunpack.c.h.b16 %v296
    %v1153 = vunpack.c.l.b16 %v297
    %v1154 = vunpack.c.h.b16 %v297
    %v1155 = vunpack.c.l.b16 %v298
    %v1156 = vunpack.c.h.b16 %v298
    %v1157 = vunpack.c.l.b16 %v299
    %v1158 = vunpack.c.h.b16 %v299
    %v1159 = vunpack.c.l.b16 %v300
    %v1160 = vunpack.c.h.b16 %v300
    %v1161 = vunpack.c.l.b16 %v301
    %v1162 = vunpack.c.h.b16 %v301
    %v1163 = vunpack.c.l.b16 %v302
    %v1164 = vunpack.c.h.b16 %v302
    %v1165 = vunpack.c.l.b16 %v303
    %v1166 = vunpack.c.h.b16 %v303
    %v1167 = vunpack.c.l.b16 %v304
    %v1168 = vunpack.c.h.b16 %v304
    %v1169 = vunpack.c.l.b16 %v305
    %v1170 = vunpack.c.h.b16 %v305
    %v1171 = vunpack.c.l.b16 %v306
    %v1172 = vunpack.c.h.b16 %v306
    %v1173 = vunpack.c.l.b16 %v307
    %v1174 = vunpack.c.h.b16 %v307
    %v1175 = vunpack.c.l.b16 %v308
    %v1176 = vunpack.c.h.b16 %v308
    %v1177 = vunpack.c.l.b16 %v309
    %v1178 = vunpack.c.h.b16 %v309
    %v1179 = vunpack.c.l.b16 %v310
    %v1180 = vunpack.c.h.b16 %v310
    %v1181 = vunpack.c.l.b16 %v311
    %v1182 = vunpack.c.h.b16 %v311
    %v1183 = vunpack.c.l.b16 %v312
    %v1184 = vunpack.c.h.b16 %v312
    %v1185 = vunpack.c.l.b16 %v313
    %v1186 = vunpack.c.h.b16 %v313
    %v1187 = vunpack.c.l.b16 %v314
    %v1188 = vunpack.c.h.b16 %v314
    %v1189 = vunpack.c.l.b16 %v315
    %v1190 = vunpack.c.h.b16 %v315
    %v1191 = vunpack.c.l.b16 %v316
    %v1192 = vunpack.c.h.b16 %v316
    %v1193 = vunpack.c.l.b16 %v317
    %v1194 = vunpack.c.h.b16 %v317
    %v1195 = vunpack.c.l.b16 %v318
    %v1196 = vunpack.c.h.b16 %v318
    %v1197 = vunpack.c.l.b16 %v319
    %v1198 = vunpack.c.h.b16 %v319
    %v1199 = vunpack.c.l.b16 %v320
    %v1200 = vunpack.c.h.b16 %v320
    %v1201 = vunpack.c.l.b16 %v321
    %v1202 = vunpack.c.h.b16 %v321
    %v1203 = vunpack.c.l.b16 %v322
    %v1204 = vunpack.c.h.b16 %v322
    %v1205 = vunpack.c.l.b16 %v323
    %v1206 = vunpack.c.h.b16 %v323
    %v1207 = vunpack.c.l.b16 %v324
    %v1208 = vunpack.c.h.b16 %v324
    %v1209 = vunpack.c.l.b16 %v325
    %v1210 = vunpack.c.h.b16 %v325
    %v1211 = vunpack.c.l.b16 %v326
    %v1212 = vunpack.c.h.b16 %v326
    %v1213 = vunpack.c.l.b16 %v327
    %v1214 = vunpack.c.h.b16 %v327
    %v1215 = vunpack.c.l.b16 %v328
    %v1216 = vunpack.c.h.b16 %v328
    %v1217 = vunpack.c.l.b16 %v329
    %v1218 = vunpack.c.h.b16 %v329
    %v1219 = vunpack.c.l.b16 %v330
    %v1220 = vunpack.c.h.b16 %v330
    %v1221 = vunpack.c.l.b16 %v331
    %v1222 = vunpack.c.h.b16 %v331
    %v1223 = vunpack.c.l.b16 %v332
    %v1224 = vunpack.c.h.b16 %v332
    %v1225 = vunpack.c.l.b16 %v333
    %v1226 = vunpack.c.h.b16 %v333
    %v1227 = vunpack.c.l.b16 %v334
    %v1228 = vunpack.c.h.b16 %v334
    %v1229 = vunpack.c.l.b16 %v335
    %v1230 = vunpack.c.h.b16 %v335
    %v1231 = vunpack.c.l.b16 %v336
    %v1232 = vunpack.c.h.b16 %v336
    %v1233 = vunpack.c.l.b16 %v337
    %v1234 = vunpack.c.h.b16 %v337
    %v1235 = vunpack.c.l.b16 %v338
    %v1236 = vunpack.c.h.b16 %v338
    %v1237 = vunpack.c.l.b16 %v339
    %v1238 = vunpack.c.h.b16 %v339
    %v1239 = vunpack.c.l.b16 %v340
    %v1240 = vunpack.c.h.b16 %v340
    %v1241 = vunpack.c.l.b16 %v341
    %v1242 = vunpack.c.h.b16 %v341
    %v1243 = vunpack.c.l.b16 %v342
    %v1244 = vunpack.c.h.b16 %v342
    %v1245 = vunpack.c.l.b16 %v343
    %v1246 = vunpack.c.h.b16 %v343
    %v1247 = vunpack.c.l.b16 %v344
    %v1248 = vunpack.c.h.b16 %v344
    %v1249 = vunpack.c.l.b16 %v345
    %v1250 = vunpack.c.h.b16 %v345
    %v1251 = vunpack.c.l.b16 %v346
    %v1252 = vunpack.c.h.b16 %v346
    %v1253 = vunpack.c.l.b16 %v347
    %v1254 = vunpack.c.h.b16 %v347
    %v1255 = vunpack.c.l.b16 %v348
    %v1256 = vunpack.c.h.b16 %v348
    %v1257 = vunpack.c.l.b16 %v349
    %v1258 = vunpack.c.h.b16 %v349
    %v1259 = vunpack.c.l.b16 %v350
    %v1260 = vunpack.c.h.b16 %v350
    %v1261 = vunpack.c.l.b16 %v351
    %v1262 = vunpack.c.h.b16 %v351
    %v1263 = vunpack.c.l.b16 %v352
    %v1264 = vunpack.c.h.b16 %v352
    %v1265 = vunpack.c.l.b16 %v353
    %v1266 = vunpack.c.h.b16 %v353
    %v1267 = vunpack.c.l.b16 %v354
    %v1268 = vunpack.c.h.b16 %v354
    %v1269 = vunpack.c.l.b16 %v355
    %v1270 = vunpack.c.h.b16 %v355
    %v1271 = vunpack.c.l.b16 %v356
    %v1272 = vunpack.c.h.b16 %v356
    %v1273 = vunpack.c.l.b16 %v357
    %v1274 = vunpack.c.h.b16 %v357
    %v1275 = vunpack.c.l.b16 %v358
    %v1276 = vunpack.c.h.b16 %v358
    %v1277 = vunpack.c.l.b16 %v359
    %v1278 = vunpack.c.h.b16 %v359
    %v1279 = vunpack.c.l.b16 %v360
    %v1280 = vunpack.c.h.b16 %v360
    %v1281 = vunpack.c.l.b16 %v361
    %v1282 = vunpack.c.h.b16 %v361
    %v1283 = vunpack.c.l.b16 %v362
    %v1284 = vunpack.c.h.b16 %v362
    %v1285 = vunpack.c.l.b16 %v363
    %v1286 = vunpack.c.h.b16 %v363
    %v1287 = vunpack.c.l.b16 %v364
    %v1288 = vunpack.c.h.b16 %v364
    %v1289 = vunpack.c.l.b16 %v365
    %v1290 = vunpack.c.h.b16 %v365
    %v1291 = vunpack.c.l.b16 %v366
    %v1292 = vunpack.c.h.b16 %v366
    %v1293 = vunpack.c.l.b16 %v367
    %v1294 = vunpack.c.h.b16 %v367
    %v1295 = vunpack.c.l.b16 %v368
    %v1296 = vunpack.c.h.b16 %v368
    %v1297 = vunpack.c.l.b16 %v369
    %v1298 = vunpack.c.h.b16 %v369
    %v1299 = vunpack.c.l.b16 %v370
    %v1300 = vunpack.c.h.b16 %v370
    %v1301 = vunpack.c.l.b16 %v371
    %v1302 = vunpack.c.h.b16 %v371
    %v1303 = vunpack.c.l.b16 %v372
    %v1304 = vunpack.c.h.b16 %v372
    %v1305 = vunpack.c.l.b16 %v373
    %v1306 = vunpack.c.h.b16 %v373
    %v1307 = vunpack.c.l.b16 %v374
    %v1308 = vunpack.c.h.b16 %v374
    %v1309 = vunpack.c.l.b16 %v375
    %v1310 = vunpack.c.h.b16 %v375
    %v1311 = vunpack.c.l.b16 %v376
    %v1312 = vunpack.c.h.b16 %v376
    %v1313 = vunpack.c.l.b16 %v377
    %v1314 = vunpack.c.h.b16 %v377
    %v1315 = vunpack.c.l.b16 %v378
    %v1316 = vunpack.c.h.b16 %v378
    %v1317 = vunpack.c.l.b16 %v379
    %v1318 = vunpack.c.h.b16 %v379
    %v1319 = vunpack.c.l.b16 %v380
    %v1320 = vunpack.c.h.b16 %v380
    %v1321 = vunpack.c.l.b16 %v381
    %v1322 = vunpack.c.h.b16 %v381
    %v1323 = vunpack.c.l.b16 %v382
    %v1324 = vunpack.c.h.b16 %v382
    %v1325 = vunpack.c.l.b16 %v383
    %v1326 = vunpack.c.h.b16 %v383
    %v1327 = vunpack.c.l.b16 %v384
    %v1328 = vunpack.c.h.b16 %v384
    %v1329 = vunpack.c.l.b16 %v385
    %v1330 = vunpack.c.h.b16 %v385
    %v1331 = vunpack.c.l.b16 %v386
    %v1332 = vunpack.c.h.b16 %v386
    %v1333 = vunpack.c.l.b16 %v387
    %v1334 = vunpack.c.h.b16 %v387
    %v1335 = vunpack.c.l.b16 %v388
    %v1336 = vunpack.c.h.b16 %v388
    %v1337 = vunpack.c.l.b16 %v389
    %v1338 = vunpack.c.h.b16 %v389
    %v1339 = vunpack.c.l.b16 %v390
    %v1340 = vunpack.c.h.b16 %v390
    %v1341 = vpack.c.b16 %v771, %v765
    %v1342 = vpack.c.b16 %v772, %v766
    %v1343 = vpack.c.b16 %v773, %v767
    %v1344 = vpack.c.b16 %v774, %v768
    %v1345 = vpack.c.b16 %v775, %v769
    %v1346 = vpack.c.b16 %v776, %v770
    %v1347 = vpack.c.b16 %v783, %v777
    %v1348 = vpack.c.b16 %v784, %v778
    %v1349 = vpack.c.b16 %v785, %v779
    %v1350 = vpack.c.b16 %v786, %v780
    %v1351 = vpack.c.b16 %v787, %v781
    %v1352 = vpack.c.b16 %v788, %v782
    %v1353 = vpack.c.b16 %v795, %v789
    %v1354 = vpack.c.b16 %v796, %v790
    %v1355 = vpack.c.b16 %v797, %v791
    %v1356 = vpack.c.b16 %v798, %v792
    %v1357 = vpack.c.b16 %v799, %v793
    %v1358 = vpack.c.b16 %v800, %v794
    %v1359 = vpack.c.b16 %v807, %v801
    %v1360 = vpack.c.b16 %v808, %v802
    %v1361 = vpack.c.b16 %v809, %v803
    %v1362 = vpack.c.b16 %v810, %v804
    %v1363 = vpack.c.b16 %v811, %v805
    %v1364 = vpack.c.b16 %v812, %v806
    %v1365 = vpack.c.b16 %v819, %v813
    %v1366 = vpack.c.b16 %v820, %v814
    %v1367 = vpack.c.b16 %v821, %v815
    %v1368 = vpack.c.b16 %v822, %v816
    %v1369 = vpack.c.b16 %v823, %v817
    %v1370 = vpack.c.b16 %v824, %v818
    %v1371 = vpack.c.b16 %v831, %v825
    %v1372 = vpack.c.b16 %v832, %v826
    %v1373 = vpack.c.b16 %v833, %v827
    %v1374 = vpack.c.b16 %v834, %v828
    %v1375 = vpack.c.b16 %v835, %v829
    %v1376 = vpack.c.b16 %v836, %v830
    %v1377 = vpack.c.b16 %v843, %v837
    %v1378 = vpack.c.b16 %v844, %v838
    %v1379 = vpack.c.b16 %v845, %v839
    %v1380 = vpack.c.b16 %v846, %v840
    %v1381 = vpack.c.b16 %v847, %v841
    %v1382 = vpack.c.b16 %v848, %v842
    %v1383 = vpack.c.b16 %v855, %v849
    %v1384 = vpack.c.b16 %v856, %v850
    %v1385 = vpack.c.b16 %v857, %v851
    %v1386 = vpack.c.b16 %v858, %v852
    %v1387 = vpack.c.b16 %v859, %v853
    %v1388 = vpack.c.b16 %v860, %v854
    %v1389 = vpack.c.b16 %v867, %v861
    %v1390 = vpack.c.b16 %v868, %v862
    %v1391 = vpack.c.b16 %v869, %v863
    %v1392 = vpack.c.b16 %v870, %v864
    %v1393 = vpack.c.b16 %v871, %v865
    %v1394 = vpack.c.b16 %v872, %v866
    %v1395 = vpack.c.b16 %v879, %v873
    %v1396 = vpack.c.b16 %v880, %v874
    %v1397 = vpack.c.b16 %v881, %v875
    %v1398 = vpack.c.b16 %v882, %v876
    %v1399 = vpack.c.b16 %v883, %v877
    %v1400 = vpack.c.b16 %v884, %v878
    %v1401 = vpack.c.b16 %v891, %v885
    %v1402 = vpack.c.b16 %v892, %v886
    %v1403 = vpack.c.b16 %v893, %v887
    %v1404 = vpack.c.b16 %v894, %v888
    %v1405 = vpack.c.b16 %v895, %v889
    %v1406 = vpack.c.b16 %v896, %v890
    %v1407 = vpack.c.b16 %v903, %v897
    %v1408 = vpack.c.b16 %v904, %v898
    %v1409 = vpack.c.b16 %v905, %v899
    %v1410 = vpack.c.b16 %v906, %v900
    %v1411 = vpack.c.b16 %v907, %v901
    %v1412 = vpack.c.b16 %v908, %v902
    %v1413 = vpack.c.b16 %v915, %v909
    %v1414 = vpack.c.b16 %v916, %v910
    %v1415 = vpack.c.b16 %v917, %v911
    %v1416 = vpack.c.b16 %v918, %v912
    %v1417 = vpack.c.b16 %v919, %v913
    %v1418 = vpack.c.b16 %v920, %v914
    %v1419 = vpack.c.b16 %v927, %v921
    %v1420 = vpack.c.b16 %v928, %v922
    %v1421 = vpack.c.b16 %v929, %v923
    %v1422 = vpack.c.b16 %v930, %v924
    %v1423 = vpack.c.b16 %v931, %v925
    %v1424 = vpack.c.b16 %v932, %v926
    %v1425 = vpack.c.b16 %v939, %v933
    %v1426 = vpack.c.b16 %v940, %v934
    %v1427 = vpack.c.b16 %v941, %v935
    %v1428 = vpack.c.b16 %v942, %v936
    %v1429 = vpack.c.b16 %v943, %v937
    %v1430 = vpack.c.b16 %v944, %v938
    %v1431 = vpack.c.b16 %v951, %v945
    %v1432 = vpack.c.b16 %v952, %v946
    %v1433 = vpack.c.b16 %v953, %v947
    %v1434 = vpack.c.b16 %v954, %v948
    %v1435 = vpack.c.b16 %v955, %v949
    %v1436 = vpack.c.b16 %v956, %v950
    %v1437 = vpack.c.b16 %v963, %v957
    %v1438 = vpack.c.b16 %v964, %v958
    %v1439 = vpack.c.b16 %v965, %v959
    %v1440 = vpack.c.b16 %v966, %v960
    %v1441 = vpack.c.b16 %v967, %v961
    %v1442 = vpack.c.b16 %v968, %v962
    %v1443 = vpack.c.b16 %v975, %v969
    %v1444 = vpack.c.b16 %v976, %v970
    %v1445 = vpack.c.b16 %v977, %v971
    %v1446 = vpack.c.b16 %v978, %v972
    %v1447 = vpack.c.b16 %v979, %v973
    %v1448 = vpack.c.b16 %v980, %v974
    %v1449 = vpack.c.b16 %v987, %v981
    %v1450 = vpack.c.b16 %v988, %v982
    %v1451 = vpack.c.b16 %v989, %v983
    %v1452 = vpack.c.b16 %v990, %v984
    %v1453 = vpack.c.b16 %v991, %v985
    %v1454 = vpack.c.b16 %v992, %v986
    %v1455 = vpack.c.b16 %v999, %v993
    %v1456 = vpack.c.b16 %v1000, %v994
    %v1457 = vpack.c.b16 %v1001, %v995
    %v1458 = vpack.c.b16 %v1002, %v996
    %v1459 = vpack.c.b16 %v1003, %v997
    %v1460 = vpack.c.b16 %v1004, %v998
    %v1461 = vpack.c.b16 %v1011, %v1005
    %v1462 = vpack.c.b16 %v1012, %v1006
    %v1463 = vpack.c.b16 %v1013, %v1007
    %v1464 = vpack.c.b16 %v1014, %v1008
    %v1465 = vpack.c.b16 %v1015, %v1009
    %v1466 = vpack.c.b16 %v1016, %v1010
    %v1467 = vpack.c.b16 %v1023, %v1017
    %v1468 = vpack.c.b16 %v1024, %v1018
    %v1469 = vpack.c.b16 %v1025, %v1019
    %v1470 = vpack.c.b16 %v1026, %v1020
    %v1471 = vpack.c.b16 %v1027, %v1021
    %v1472 = vpack.c.b16 %v1028, %v1022
    %v1473 = vpack.c.b16 %v1035, %v1029
    %v1474 = vpack.c.b16 %v1036, %v1030
    %v1475 = vpack.c.b16 %v1037, %v1031
    %v1476 = vpack.c.b16 %v1038, %v1032
    %v1477 = vpack.c.b16 %v1039, %v1033
    %v1478 = vpack.c.b16 %v1040, %v1034
    %v1479 = vpack.c.b16 %v1047, %v1041
    %v1480 = vpack.c.b16 %v1048, %v1042
    %v1481 = vpack.c.b16 %v1049, %v1043
    %v1482 = vpack.c.b16 %v1050, %v1044
    %v1483 = vpack.c.b16 %v1051, %v1045
    %v1484 = vpack.c.b16 %v1052, %v1046
    %v1485 = vpack.c.b16 %v1059, %v1053
    %v1486 = vpack.c.b16 %v1060, %v1054
    %v1487 = vpack.c.b16 %v1061, %v1055
    %v1488 = vpack.c.b16 %v1062, %v1056
    %v1489 = vpack.c.b16 %v1063, %v1057
    %v1490 = vpack.c.b16 %v1064, %v1058
    %v1491 = vpack.c.b16 %v1071, %v1065
    %v1492 = vpack.c.b16 %v1072, %v1066
    %v1493 = vpack.c.b16 %v1073, %v1067
    %v1494 = vpack.c.b16 %v1074, %v1068
    %v1495 = vpack.c.b16 %v1075, %v1069
    %v1496 = vpack.c.b16 %v1076, %v1070
    %v1497 = vpack.c.b16 %v1083, %v1077
    %v1498 = vpack.c.b16 %v1084, %v1078
    %v1499 = vpack.c.b16 %v1085, %v1079
    %v1500 = vpack.c.b16 %v1086, %v1080
    %v1501 = vpack.c.b16 %v1087, %v1081
    %v1502 = vpack.c.b16 %v1088, %v1082
    %v1503 = vpack.c.b16 %v1095, %v1089
    %v1504 = vpack.c.b16 %v1096, %v1090
    %v1505 = vpack.c.b16 %v1097, %v1091
    %v1506 = vpack.c.b16 %v1098, %v1092
    %v1507 = vpack.c.b16 %v1099, %v1093
    %v1508 = vpack.c.b16 %v1100, %v1094
    %v1509 = vpack.c.b16 %v1107, %v1101
    %v1510 = vpack.c.b16 %v1108, %v1102
    %v1511 = vpack.c.b16 %v1109, %v1103
    %v1512 = vpack.c.b16 %v1110, %v1104
    %v1513 = vpack.c.b16 %v1111, %v1105
    %v1514 = vpack.c.b16 %v1112, %v1106
    %v1515 = vpack.c.b16 %v1119, %v1113
    %v1516 = vpack.c.b16 %v1120, %v1114
    %v1517 = vpack.c.b16 %v1121, %v1115
    %v1518 = vpack.c.b16 %v1122, %v1116
    %v1519 = vpack.c.b16 %v1123, %v1117
    %v1520 = vpack.c.b16 %v1124, %v1118
    %v1521 = vpack.c.b16 %v1131, %v1125
    %v1522 = vpack.c.b16 %v1132, %v1126
    %v1523 = vpack.c.b16 %v1133, %v1127
    %v1524 = vpack.c.b16 %v1134, %v1128
    %v1525 = vpack.c.b16 %v1135, %v1129
    %v1526 = vpack.c.b16 %v1136, %v1130
    %v1527 = vpack.c.b16 %v1143, %v1137
    %v1528 = vpack.c.b16 %v1144, %v1138
    %v1529 = vpack.c.b16 %v1145, %v1139
    %v1530 = vpack.c.b16 %v1146, %v1140
    %v1531 = vpack.c.b16 %v1147, %v1141
    %v1532 = vpack.c.b16 %v1148, %v1142
    %v1533 = vpack.c.b16 %v1155, %v1149
    %v1534 = vpack.c.b16 %v1156, %v1150
    %v1535 = vpack.c.b16 %v1157, %v1151
    %v1536 = vpack.c.b16 %v1158, %v1152
    %v1537 = vpack.c.b16 %v1159, %v1153
    %v1538 = vpack.c.b16 %v1160, %v1154
    %v1539 = vpack.c.b16 %v1167, %v1161
    %v1540 = vpack.c.b16 %v1168, %v1162
    %v1541 = vpack.c.b16 %v1169, %v1163
    %v1542 = vpack.c.b16 %v1170, %v1164
    %v1543 = vpack.c.b16 %v1171, %v1165
    %v1544 = vpack.c.b16 %v1172, %v1166
    %v1545 = vpack.c.b16 %v1179, %v1173
    %v1546 = vpack.c.b16 %v1180, %v1174
    %v1547 = vpack.c.b16 %v1181, %v1175
    %v1548 = vpack.c.b16 %v1182, %v1176
    %v1549 = vpack.c.b16 %v1183, %v1177
    %v1550 = vpack.c.b16 %v1184, %v1178
    %v1551 = vpack.c.b16 %v1191, %v1185
    %v1552 = vpack.c.b16 %v1192, %v1186
    %v1553 = vpack.c.b16 %v1193, %v1187
    %v1554 = vpack.c.b16 %v1194, %v1188
    %v1555 = vpack.c.b16 %v1195, %v1189
    %v1556 = vpack.c.b16 %v1196, %v1190
    %v1557 = vpack.c.b16 %v1203, %v1197
    %v1558 = vpack.c.b16 %v1204, %v1198
    %v1559 = vpack.c.b16 %v1205, %v1199
    %v1560 = vpack.c.b16 %v1206, %v1200
    %v1561 = vpack.c.b16 %v1207, %v1201
    %v1562 = vpack.c.b16 %v1208, %v1202
    %v1563 = vpack.c.b16 %v1215, %v1209
    %v1564 = vpack.c.b16 %v1216, %v1210
    %v1565 = vpack.c.b16 %v1217, %v1211
    %v1566 = vpack.c.b16 %v1218, %v1212
    %v1567 = vpack.c.b16 %v1219, %v1213
    %v1568 = vpack.c.b16 %v1220, %v1214
    %v1569 = vpack.c.b16 %v1227, %v1221
    %v1570 = vpack.c.b16 %v1228, %v1222
    %v1571 = vpack.c.b16 %v1229, %v1223
    %v1572 = vpack.c.b16 %v1230, %v1224
    %v1573 = vpack.c.b16 %v1231, %v1225
    %v1574 = vpack.c.b16 %v1232, %v1226
    %v1575 = vpack.c.b16 %v1239, %v1233
    %v1576 = vpack.c.b16 %v1240, %v1234
    %v1577 = vpack.c.b16 %v1241, %v1235
    %v1578 = vpack.c.b16 %v1242, %v1236
    %v1579 = vpack.c.b16 %v1243, %v1237
    %v1580 = vpack.c.b16 %v1244, %v1238
    %v1581 = vpack.c.b16 %v1251, %v1245
    %v1582 = vpack.c.b16 %v1252, %v1246
    %v1583 = vpack.c.b16 %v1253, %v1247
    %v1584 = vpack.c.b16 %v1254, %v1248
    %v1585 = vpack.c.b16 %v1255, %v1249
    %v1586 = vpack.c.b16 %v1256, %v1250
    %v1587 = vpack.c.b16 %v1263, %v1257
    %v1588 = vpack.c.b16 %v1264, %v1258
    %v1589 = vpack.c.b16 %v1265, %v1259
    %v1590 = vpack.c.b16 %v1266, %v1260
    %v1591 = vpack.c.b16 %v1267, %v1261
    %v1592 = vpack.c.b16 %v1268, %v1262
    %v1593 = vpack.c.b16 %v1275, %v1269
    %v1594 = vpack.c.b16 %v1276, %v1270
    %v1595 = vpack.c.b16 %v1277, %v1271
    %v1596 = vpack.c.b16 %v1278, %v1272
    %v1597 = vpack.c.b16 %v1279, %v1273
    %v1598 = vpack.c.b16 %v1280, %v1274
    %v1599 = vpack.c.b16 %v1287, %v1281
    %v1600 = vpack.c.b16 %v1288, %v1282
    %v1601 = vpack.c.b16 %v1289, %v1283
    %v1602 = vpack.c.b16 %v1290, %v1284
    %v1603 = vpack.c.b16 %v1291, %v1285
    %v1604 = vpack.c.b16 %v1292, %v1286
    %v1605 = vpack.c.b16 %v1299, %v1293
    %v1606 = vpack.c.b16 %v1300, %v1294
    %v1607 = vpack.c.b16 %v1301, %v1295
    %v1608 = vpack.c.b16 %v1302, %v1296
    %v1609 = vpack.c.b16 %v1303, %v1297
    %v1610 = vpack.c.b16 %v1304, %v1298
    %v1611 = vpack.c.b16 %v1311, %v1305
    %v1612 = vpack.c.b16 %v1312, %v1306
    %v1613 = vpack.c.b16 %v1313, %v1307
    %v1614 = vpack.c.b16 %v1314, %v1308
    %v1615 = vpack.c.b16 %v1315, %v1309
    %v1616 = vpack.c.b16 %v1316, %v1310
    %v1617 = vpack.c.b16 %v1323, %v1317
    %v1618 = vpack.c.b16 %v1324, %v1318
    %v1619 = vpack.c.b16 %v1325, %v1319
    %v1620 = vpack.c.b16 %v1326, %v1320
    %v1621 = vpack.c.b16 %v1327, %v1321
    %v1622 = vpack.c.b16 %v1328, %v1322
    %v1623 = vpack.c.b16 %v1335, %v1329
    %v1624 = vpack.c.b16 %v1336, %v1330
    %v1625 = vpack.c.b16 %v1337, %v1331
    %v1626 = vpack.c.b16 %v1338, %v1332
    %v1627 = vpack.c.b16 %v1339, %v1333
    %v1628 = vpack.c.b16 %v1340, %v1334
    %1917 = vmatprep.subr.bf16.mxu0 %v1342
    %1918 = vmatpush1.bf16.msra.mxu0 %v1341
    %1919 = vmatprep.subr.bf16.mxu0 %v1348
    %1920 = vmatpush1.bf16.msra.mxu0 %v1347
    %1921 = vmatprep.subr.bf16.mxu0 %v1354
    %1922 = vmatpush1.bf16.msra.mxu0 %v1353
    %1923 = vmatprep.subr.bf16.mxu0 %v1360
    %1924 = vmatpush1.bf16.msra.mxu0 %v1359
    %1925 = vmatprep.subr.bf16.mxu0 %v1366
    %1926 = vmatpush1.bf16.msra.mxu0 %v1365
    %1927 = vmatprep.subr.bf16.mxu0 %v1372
    %1928 = vmatpush1.bf16.msra.mxu0 %v1371
    %1929 = vmatprep.subr.bf16.mxu0 %v1378
    %1930 = vmatpush1.bf16.msra.mxu0 %v1377
    %1931 = vmatprep.subr.bf16.mxu0 %v1384
    %1932 = vmatpush1.bf16.msra.mxu0 %v1383
    %1933 = vmatprep.subr.bf16.mxu0 %v1390
    %1934 = vmatpush1.bf16.msra.mxu0 %v1389
    %1935 = vmatprep.subr.bf16.mxu0 %v1396
    %1936 = vmatpush1.bf16.msra.mxu0 %v1395
    %1937 = vmatprep.subr.bf16.mxu0 %v1402
    %1938 = vmatpush1.bf16.msra.mxu0 %v1401
    %1939 = vmatprep.subr.bf16.mxu0 %v1408
    %1940 = vmatpush1.bf16.msra.mxu0 %v1407
    %1941 = vmatprep.subr.bf16.mxu0 %v1414
    %1942 = vmatpush1.bf16.msra.mxu0 %v1413
    %1943 = vmatprep.subr.bf16.mxu0 %v1420
    %1944 = vmatpush1.bf16.msra.mxu0 %v1419
    %1945 = vmatprep.subr.bf16.mxu0 %v1426
    %1946 = vmatpush1.bf16.msra.mxu0 %v1425
    %1947 = vmatprep.subr.bf16.mxu0 %v1432
    %1948 = vmatpush1.bf16.msra.mxu0 %v1431
    %1949 = vmatprep.mubr.bf16.mxu0 %v461
    %1950 = vmatmul.mubr.bf16.gmra.mrb[0].mxu0 %v447
    %v1951 = vpop.f32.mrb[0].mxu0
    %v1952 = vadd.f32 %v396, %v1951
    %v1953 = vpop.f32.mrb[0].mxu0
    %v1954 = vadd.f32 %v400, %v1953
    %v1955 = vpop.f32.mrb[0].mxu0
    %v1956 = vpop.f32.mrb[0].mxu0
    %1957 = vdwg.mxu0
    %1958 = vmatprep.subr.bf16.mxu0 %v1438
    %1959 = vmatpush1.bf16.msra.mxu0 %v1437
    %1960 = vmatprep.subr.bf16.mxu0 %v1444
    %1961 = vmatpush1.bf16.msra.mxu0 %v1443
    %1962 = vmatprep.subr.bf16.mxu0 %v1450
    %1963 = vmatpush1.bf16.msra.mxu0 %v1449
    %1964 = vmatprep.subr.bf16.mxu0 %v1456
    %1965 = vmatpush1.bf16.msra.mxu0 %v1455
    %1966 = vmatprep.subr.bf16.mxu0 %v1462
    %1967 = vmatpush1.bf16.msra.mxu0 %v1461
    %1968 = vmatprep.subr.bf16.mxu0 %v1468
    %1969 = vmatpush1.bf16.msra.mxu0 %v1467
    %1970 = vmatprep.subr.bf16.mxu0 %v1474
    %1971 = vmatpush1.bf16.msra.mxu0 %v1473
    %1972 = vmatprep.subr.bf16.mxu0 %v1480
    %1973 = vmatpush1.bf16.msra.mxu0 %v1479
    %1974 = vmatprep.subr.bf16.mxu0 %v1486
    %1975 = vmatpush1.bf16.msra.mxu0 %v1485
    %1976 = vmatprep.subr.bf16.mxu0 %v1492
    %1977 = vmatpush1.bf16.msra.mxu0 %v1491
    %1978 = vmatprep.subr.bf16.mxu0 %v1498
    %1979 = vmatpush1.bf16.msra.mxu0 %v1497
    %1980 = vmatprep.subr.bf16.mxu0 %v1504
    %1981 = vmatpush1.bf16.msra.mxu0 %v1503
    %1982 = vmatprep.subr.bf16.mxu0 %v1510
    %1983 = vmatpush1.bf16.msra.mxu0 %v1509
    %1984 = vmatprep.subr.bf16.mxu0 %v1516
    %1985 = vmatpush1.bf16.msra.mxu0 %v1515
    %1986 = vmatprep.subr.bf16.mxu0 %v1522
    %1987 = vmatpush1.bf16.msra.mxu0 %v1521
    %1988 = vmatprep.subr.bf16.mxu0 %v1528
    %1989 = vmatpush1.bf16.msra.mxu0 %v1527
    %1990 = vmatprep.mubr.bf16.mxu0 %v470
    %1991 = vmatmul.mubr.bf16.gmra.mrb[0].mxu0 %v469
    %v1992 = vpop.f32.mrb[0].mxu0
    %v1993 = vadd.f32 %v1952, %v1992
    %v1994 = vpop.f32.mrb[0].mxu0
    %v1995 = vadd.f32 %v1954, %v1994
    %v1996 = vpop.f32.mrb[0].mxu0
    %v1997 = vpop.f32.mrb[0].mxu0
    %1998 = vdwg.mxu0
    %1999 = vmatprep.subr.bf16.mxu0 %v1534
    %2000 = vmatpush1.bf16.msra.mxu0 %v1533
    %2001 = vmatprep.subr.bf16.mxu0 %v1540
    %2002 = vmatpush1.bf16.msra.mxu0 %v1539
    %2003 = vmatprep.subr.bf16.mxu0 %v1546
    %2004 = vmatpush1.bf16.msra.mxu0 %v1545
    %2005 = vmatprep.subr.bf16.mxu0 %v1552
    %2006 = vmatpush1.bf16.msra.mxu0 %v1551
    %2007 = vmatprep.subr.bf16.mxu0 %v1558
    %2008 = vmatpush1.bf16.msra.mxu0 %v1557
    %2009 = vmatprep.subr.bf16.mxu0 %v1564
    %2010 = vmatpush1.bf16.msra.mxu0 %v1563
    %2011 = vmatprep.subr.bf16.mxu0 %v1570
    %2012 = vmatpush1.bf16.msra.mxu0 %v1569
    %2013 = vmatprep.subr.bf16.mxu0 %v1576
    %2014 = vmatpush1.bf16.msra.mxu0 %v1575
    %2015 = vmatprep.subr.bf16.mxu0 %v1582
    %2016 = vmatpush1.bf16.msra.mxu0 %v1581
    %2017 = vmatprep.subr.bf16.mxu0 %v1588
    %2018 = vmatpush1.bf16.msra.mxu0 %v1587
    %2019 = vmatprep.subr.bf16.mxu0 %v1594
    %2020 = vmatpush1.bf16.msra.mxu0 %v1593
    %2021 = vmatprep.subr.bf16.mxu0 %v1600
    %2022 = vmatpush1.bf16.msra.mxu0 %v1599
    %2023 = vmatprep.subr.bf16.mxu0 %v1606
    %2024 = vmatpush1.bf16.msra.mxu0 %v1605
    %2025 = vmatprep.subr.bf16.mxu0 %v1612
    %2026 = vmatpush1.bf16.msra.mxu0 %v1611
    %2027 = vmatprep.subr.bf16.mxu0 %v1618
    %2028 = vmatpush1.bf16.msra.mxu0 %v1617
    %2029 = vmatprep.subr.bf16.mxu0 %v1624
    %2030 = vmatpush1.bf16.msra.mxu0 %v1623
    %2031 = vmatprep.mubr.bf16.mxu0 %v468
    %2032 = vmatmul.mubr.bf16.gmra.mrb[0].mxu0 %v454
    %v2033 = vpop.f32.mrb[0].mxu0
    %v2034 = vadd.f32 %v1993, %v2033
    %v2035 = vpop.f32.mrb[0].mxu0
    %v2036 = vadd.f32 %v1995, %v2035
    %v2037 = vpop.f32.mrb[0].mxu0
    %v2038 = vpop.f32.mrb[0].mxu0
    %2039 = vdwg.mxu0
    %2040 = vmatprep.subr.bf16.mxu0 %v1344
    %2041 = vmatpush1.bf16.msra.mxu0 %v1343
    %2042 = vmatprep.subr.bf16.mxu0 %v1350
    %2043 = vmatpush1.bf16.msra.mxu0 %v1349
    %2044 = vmatprep.subr.bf16.mxu0 %v1356
    %2045 = vmatpush1.bf16.msra.mxu0 %v1355
    %2046 = vmatprep.subr.bf16.mxu0 %v1362
    %2047 = vmatpush1.bf16.msra.mxu0 %v1361
    %2048 = vmatprep.subr.bf16.mxu0 %v1368
    %2049 = vmatpush1.bf16.msra.mxu0 %v1367
    %2050 = vmatprep.subr.bf16.mxu0 %v1374
    %2051 = vmatpush1.bf16.msra.mxu0 %v1373
    %2052 = vmatprep.subr.bf16.mxu0 %v1380
    %2053 = vmatpush1.bf16.msra.mxu0 %v1379
    %2054 = vmatprep.subr.bf16.mxu0 %v1386
    %2055 = vmatpush1.bf16.msra.mxu0 %v1385
    %2056 = vmatprep.subr.bf16.mxu0 %v1392
    %2057 = vmatpush1.bf16.msra.mxu0 %v1391
    %2058 = vmatprep.subr.bf16.mxu0 %v1398
    %2059 = vmatpush1.bf16.msra.mxu0 %v1397
    %2060 = vmatprep.subr.bf16.mxu0 %v1404
    %2061 = vmatpush1.bf16.msra.mxu0 %v1403
    %2062 = vmatprep.subr.bf16.mxu0 %v1410
    %2063 = vmatpush1.bf16.msra.mxu0 %v1409
    %2064 = vmatprep.subr.bf16.mxu0 %v1416
    %2065 = vmatpush1.bf16.msra.mxu0 %v1415
    %2066 = vmatprep.subr.bf16.mxu0 %v1422
    %2067 = vmatpush1.bf16.msra.mxu0 %v1421
    %2068 = vmatprep.subr.bf16.mxu0 %v1428
    %2069 = vmatpush1.bf16.msra.mxu0 %v1427
    %2070 = vmatprep.subr.bf16.mxu0 %v1434
    %2071 = vmatpush1.bf16.msra.mxu0 %v1433
    %2072 = vmatprep.mubr.bf16.mxu0 %v461
    %2073 = vmatmul.mubr.bf16.gmra.mrb[0].mxu0 %v447
    %v2074 = vpop.f32.mrb[0].mxu0
    %v2075 = vadd.f32 %v404, %v2074
    %v2076 = vpop.f32.mrb[0].mxu0
    %v2077 = vadd.f32 %v408, %v2076
    %v2078 = vpop.f32.mrb[0].mxu0
    %v2079 = vpop.f32.mrb[0].mxu0
    %2080 = vdwg.mxu0
    %2081 = vmatprep.subr.bf16.mxu0 %v1440
    %2082 = vmatpush1.bf16.msra.mxu0 %v1439
    %2083 = vmatprep.subr.bf16.mxu0 %v1446
    %2084 = vmatpush1.bf16.msra.mxu0 %v1445
    %2085 = vmatprep.subr.bf16.mxu0 %v1452
    %2086 = vmatpush1.bf16.msra.mxu0 %v1451
    %2087 = vmatprep.subr.bf16.mxu0 %v1458
    %2088 = vmatpush1.bf16.msra.mxu0 %v1457
    %2089 = vmatprep.subr.bf16.mxu0 %v1464
    %2090 = vmatpush1.bf16.msra.mxu0 %v1463
    %2091 = vmatprep.subr.bf16.mxu0 %v1470
    %2092 = vmatpush1.bf16.msra.mxu0 %v1469
    %2093 = vmatprep.subr.bf16.mxu0 %v1476
    %2094 = vmatpush1.bf16.msra.mxu0 %v1475
    %2095 = vmatprep.subr.bf16.mxu0 %v1482
    %2096 = vmatpush1.bf16.msra.mxu0 %v1481
    %2097 = vmatprep.subr.bf16.mxu0 %v1488
    %2098 = vmatpush1.bf16.msra.mxu0 %v1487
    %2099 = vmatprep.subr.bf16.mxu0 %v1494
    %2100 = vmatpush1.bf16.msra.mxu0 %v1493
    %2101 = vmatprep.subr.bf16.mxu0 %v1500
    %2102 = vmatpush1.bf16.msra.mxu0 %v1499
    %2103 = vmatprep.subr.bf16.mxu0 %v1506
    %2104 = vmatpush1.bf16.msra.mxu0 %v1505
    %2105 = vmatprep.subr.bf16.mxu0 %v1512
    %2106 = vmatpush1.bf16.msra.mxu0 %v1511
    %2107 = vmatprep.subr.bf16.mxu0 %v1518
    %2108 = vmatpush1.bf16.msra.mxu0 %v1517
    %2109 = vmatprep.subr.bf16.mxu0 %v1524
    %2110 = vmatpush1.bf16.msra.mxu0 %v1523
    %2111 = vmatprep.subr.bf16.mxu0 %v1530
    %2112 = vmatpush1.bf16.msra.mxu0 %v1529
    %2113 = vmatprep.mubr.bf16.mxu0 %v470
    %2114 = vmatmul.mubr.bf16.gmra.mrb[0].mxu0 %v469
    %v2115 = vpop.f32.mrb[0].mxu0
    %v2116 = vadd.f32 %v2075, %v2115
    %v2117 = vpop.f32.mrb[0].mxu0
    %v2118 = vadd.f32 %v2077, %v2117
    %v2119 = vpop.f32.mrb[0].mxu0
    %v2120 = vpop.f32.mrb[0].mxu0
    %2121 = vdwg.mxu0
    %2122 = vmatprep.subr.bf16.mxu0 %v1536
    %2123 = vmatpush1.bf16.msra.mxu0 %v1535
    %2124 = vmatprep.subr.bf16.mxu0 %v1542
    %2125 = vmatpush1.bf16.msra.mxu0 %v1541
    %2126 = vmatprep.subr.bf16.mxu0 %v1548
    %2127 = vmatpush1.bf16.msra.mxu0 %v1547
    %2128 = vmatprep.subr.bf16.mxu0 %v1554
    %2129 = vmatpush1.bf16.msra.mxu0 %v1553
    %2130 = vmatprep.subr.bf16.mxu0 %v1560
    %2131 = vmatpush1.bf16.msra.mxu0 %v1559
    %2132 = vmatprep.subr.bf16.mxu0 %v1566
    %2133 = vmatpush1.bf16.msra.mxu0 %v1565
    %2134 = vmatprep.subr.bf16.mxu0 %v1572
    %2135 = vmatpush1.bf16.msra.mxu0 %v1571
    %2136 = vmatprep.subr.bf16.mxu0 %v1578
    %2137 = vmatpush1.bf16.msra.mxu0 %v1577
    %2138 = vmatprep.subr.bf16.mxu0 %v1584
    %2139 = vmatpush1.bf16.msra.mxu0 %v1583
    %2140 = vmatprep.subr.bf16.mxu0 %v1590
    %2141 = vmatpush1.bf16.msra.mxu0 %v1589
    %2142 = vmatprep.subr.bf16.mxu0 %v1596
    %2143 = vmatpush1.bf16.msra.mxu0 %v1595
    %2144 = vmatprep.subr.bf16.mxu0 %v1602
    %2145 = vmatpush1.bf16.msra.mxu0 %v1601
    %2146 = vmatprep.subr.bf16.mxu0 %v1608
    %2147 = vmatpush1.bf16.msra.mxu0 %v1607
    %2148 = vmatprep.subr.bf16.mxu0 %v1614
    %2149 = vmatpush1.bf16.msra.mxu0 %v1613
    %2150 = vmatprep.subr.bf16.mxu0 %v1620
    %2151 = vmatpush1.bf16.msra.mxu0 %v1619
    %2152 = vmatprep.subr.bf16.mxu0 %v1626
    %2153 = vmatpush1.bf16.msra.mxu0 %v1625
    %2154 = vmatprep.mubr.bf16.mxu0 %v468
    %2155 = vmatmul.mubr.bf16.gmra.mrb[0].mxu0 %v454
    %v2156 = vpop.f32.mrb[0].mxu0
    %v2157 = vadd.f32 %v2116, %v2156
    %v2158 = vpop.f32.mrb[0].mxu0
    %v2159 = vadd.f32 %v2118, %v2158
    %v2160 = vpop.f32.mrb[0].mxu0
    %v2161 = vpop.f32.mrb[0].mxu0
    %2162 = vdwg.mxu0
    %2163 = vmatprep.subr.bf16.mxu0 %v1346
    %2164 = vmatpush1.bf16.msra.mxu0 %v1345
    %2165 = vmatprep.subr.bf16.mxu0 %v1352
    %2166 = vmatpush1.bf16.msra.mxu0 %v1351
    %2167 = vmatprep.subr.bf16.mxu0 %v1358
    %2168 = vmatpush1.bf16.msra.mxu0 %v1357
    %2169 = vmatprep.subr.bf16.mxu0 %v1364
    %2170 = vmatpush1.bf16.msra.mxu0 %v1363
    %2171 = vmatprep.subr.bf16.mxu0 %v1370
    %2172 = vmatpush1.bf16.msra.mxu0 %v1369
    %2173 = vmatprep.subr.bf16.mxu0 %v1376
    %2174 = vmatpush1.bf16.msra.mxu0 %v1375
    %2175 = vmatprep.subr.bf16.mxu0 %v1382
    %2176 = vmatpush1.bf16.msra.mxu0 %v1381
    %2177 = vmatprep.subr.bf16.mxu0 %v1388
    %2178 = vmatpush1.bf16.msra.mxu0 %v1387
    %2179 = vmatprep.subr.bf16.mxu0 %v1394
    %2180 = vmatpush1.bf16.msra.mxu0 %v1393
    %2181 = vmatprep.subr.bf16.mxu0 %v1400
    %2182 = vmatpush1.bf16.msra.mxu0 %v1399
    %2183 = vmatprep.subr.bf16.mxu0 %v1406
    %2184 = vmatpush1.bf16.msra.mxu0 %v1405
    %2185 = vmatprep.subr.bf16.mxu0 %v1412
    %2186 = vmatpush1.bf16.msra.mxu0 %v1411
    %2187 = vmatprep.subr.bf16.mxu0 %v1418
    %2188 = vmatpush1.bf16.msra.mxu0 %v1417
    %2189 = vmatprep.subr.bf16.mxu0 %v1424
    %2190 = vmatpush1.bf16.msra.mxu0 %v1423
    %2191 = vmatprep.subr.bf16.mxu0 %v1430
    %2192 = vmatpush1.bf16.msra.mxu0 %v1429
    %2193 = vmatprep.subr.bf16.mxu0 %v1436
    %2194 = vmatpush1.bf16.msra.mxu0 %v1435
    %2195 = vmatprep.mubr.bf16.mxu0 %v461
    %2196 = vmatmul.mubr.bf16.gmra.mrb[0].mxu0 %v447
    %v2197 = vpop.f32.mrb[0].mxu0
    %v2198 = vadd.f32 %v412, %v2197
    %v2199 = vpop.f32.mrb[0].mxu0
    %v2200 = vadd.f32 %v416, %v2199
    %v2201 = vpop.f32.mrb[0].mxu0
    %v2202 = vpop.f32.mrb[0].mxu0
    %2203 = vdwg.mxu0
    %2204 = vmatprep.subr.bf16.mxu0 %v1442
    %2205 = vmatpush1.bf16.msra.mxu0 %v1441
    %2206 = vmatprep.subr.bf16.mxu0 %v1448
    %2207 = vmatpush1.bf16.msra.mxu0 %v1447
    %2208 = vmatprep.subr.bf16.mxu0 %v1454
    %2209 = vmatpush1.bf16.msra.mxu0 %v1453
    %2210 = vmatprep.subr.bf16.mxu0 %v1460
    %2211 = vmatpush1.bf16.msra.mxu0 %v1459
    %2212 = vmatprep.subr.bf16.mxu0 %v1466
    %2213 = vmatpush1.bf16.msra.mxu0 %v1465
    %2214 = vmatprep.subr.bf16.mxu0 %v1472
    %2215 = vmatpush1.bf16.msra.mxu0 %v1471
    %2216 = vmatprep.subr.bf16.mxu0 %v1478
    %2217 = vmatpush1.bf16.msra.mxu0 %v1477
    %2218 = vmatprep.subr.bf16.mxu0 %v1484
    %2219 = vmatpush1.bf16.msra.mxu0 %v1483
    %2220 = vmatprep.subr.bf16.mxu0 %v1490
    %2221 = vmatpush1.bf16.msra.mxu0 %v1489
    %2222 = vmatprep.subr.bf16.mxu0 %v1496
    %2223 = vmatpush1.bf16.msra.mxu0 %v1495
    %2224 = vmatprep.subr.bf16.mxu0 %v1502
    %2225 = vmatpush1.bf16.msra.mxu0 %v1501
    %2226 = vmatprep.subr.bf16.mxu0 %v1508
    %2227 = vmatpush1.bf16.msra.mxu0 %v1507
    %2228 = vmatprep.subr.bf16.mxu0 %v1514
    %2229 = vmatpush1.bf16.msra.mxu0 %v1513
    %2230 = vmatprep.subr.bf16.mxu0 %v1520
    %2231 = vmatpush1.bf16.msra.mxu0 %v1519
    %2232 = vmatprep.subr.bf16.mxu0 %v1526
    %2233 = vmatpush1.bf16.msra.mxu0 %v1525
    %2234 = vmatprep.subr.bf16.mxu0 %v1532
    %2235 = vmatpush1.bf16.msra.mxu0 %v1531
    %2236 = vmatprep.mubr.bf16.mxu0 %v470
    %2237 = vmatmul.mubr.bf16.gmra.mrb[0].mxu0 %v469
    %v2238 = vpop.f32.mrb[0].mxu0
    %v2239 = vadd.f32 %v2198, %v2238
    %v2240 = vpop.f32.mrb[0].mxu0
    %v2241 = vadd.f32 %v2200, %v2240
    %v2242 = vpop.f32.mrb[0].mxu0
    %v2243 = vpop.f32.mrb[0].mxu0
    %2244 = vdwg.mxu0
    %2245 = vmatprep.subr.bf16.mxu0 %v1538
    %2246 = vmatpush1.bf16.msra.mxu0 %v1537
    %2247 = vmatprep.subr.bf16.mxu0 %v1544
    %2248 = vmatpush1.bf16.msra.mxu0 %v1543
    %2249 = vmatprep.subr.bf16.mxu0 %v1550
    %2250 = vmatpush1.bf16.msra.mxu0 %v1549
    %2251 = vmatprep.subr.bf16.mxu0 %v1556
    %2252 = vmatpush1.bf16.msra.mxu0 %v1555
    %2253 = vmatprep.subr.bf16.mxu0 %v1562
    %2254 = vmatpush1.bf16.msra.mxu0 %v1561
    %2255 = vmatprep.subr.bf16.mxu0 %v1568
    %2256 = vmatpush1.bf16.msra.mxu0 %v1567
    %2257 = vmatprep.subr.bf16.mxu0 %v1574
    %2258 = vmatpush1.bf16.msra.mxu0 %v1573
    %2259 = vmatprep.subr.bf16.mxu0 %v1580
    %2260 = vmatpush1.bf16.msra.mxu0 %v1579
    %2261 = vmatprep.subr.bf16.mxu0 %v1586
    %2262 = vmatpush1.bf16.msra.mxu0 %v1585
    %2263 = vmatprep.subr.bf16.mxu0 %v1592
    %2264 = vmatpush1.bf16.msra.mxu0 %v1591
    %2265 = vmatprep.subr.bf16.mxu0 %v1598
    %2266 = vmatpush1.bf16.msra.mxu0 %v1597
    %2267 = vmatprep.subr.bf16.mxu0 %v1604
    %2268 = vmatpush1.bf16.msra.mxu0 %v1603
    %2269 = vmatprep.subr.bf16.mxu0 %v1610
    %2270 = vmatpush1.bf16.msra.mxu0 %v1609
    %2271 = vmatprep.subr.bf16.mxu0 %v1616
    %2272 = vmatpush1.bf16.msra.mxu0 %v1615
    %2273 = vmatprep.subr.bf16.mxu0 %v1622
    %2274 = vmatpush1.bf16.msra.mxu0 %v1621
    %2275 = vmatprep.subr.bf16.mxu0 %v1628
    %2276 = vmatpush1.bf16.msra.mxu0 %v1627
    %2277 = vmatprep.mubr.bf16.mxu0 %v468
    %2278 = vmatmul.mubr.bf16.gmra.mrb[0].mxu0 %v454
    %v2279 = vpop.f32.mrb[0].mxu0
    %v2280 = vadd.f32 %v2239, %v2279
    %v2281 = vpop.f32.mrb[0].mxu0
    %v2282 = vadd.f32 %v2241, %v2281
    %v2283 = vpop.f32.mrb[0].mxu0
    %v2284 = vpop.f32.mrb[0].mxu0
    %2285 = vdwg.mxu0
    %v2286 = vtanh.pop %v2034
    %v2287 = vtanh.pop %v2036
    %v2288 = vtanh.pop %v2157
    %v2289 = vtanh.pop %v2159
    %v2290 = vtanh.pop %v2280
    %v2291 = vtanh.pop %v2282
    %v2292 = vpack.c.bf16 %v2286, %v2286
    %v2293 = vpack.c.bf16 %v2287, %v2287
    %v2294 = vpack.c.bf16 %v2288, %v2288
    %v2295 = vpack.c.bf16 %v2289, %v2289
    %v2296 = vpack.c.bf16 %v2290, %v2290
    %v2297 = vpack.c.bf16 %v2291, %v2291
    %v2298 = vld [vmem:[#allocation9] sm:$0xff]
    %v2299 = vld [vmem:[#allocation9 + $0x8] sm:$0xff]
    %v2300 = vld [vmem:[#allocation9 + $0x10] sm:$0xff]
    %v2301 = vld [vmem:[#allocation9 + $0x18] sm:$0xff]
    %v2302 = vld [vmem:[#allocation9 + $0x20] sm:$0xff]
    %v2303 = vld [vmem:[#allocation9 + $0x28] sm:$0xff]
    %v2304 = vld [vmem:[#allocation9 + $0x30] sm:$0xff]
    %v2305 = vld [vmem:[#allocation9 + $0x38] sm:$0xff]
    %v2306 = vld [vmem:[#allocation9 + $0x40] sm:$0xff]
    %v2307 = vld [vmem:[#allocation9 + $0x48] sm:$0xff]
    %v2308 = vld [vmem:[#allocation9 + $0x50] sm:$0xff]
    %v2309 = vld [vmem:[#allocation9 + $0x58] sm:$0xff]
    %v2310 = vld [vmem:[#allocation9 + $0x60] sm:$0xff]
    %v2311 = vld [vmem:[#allocation9 + $0x68] sm:$0xff]
    %v2312 = vld [vmem:[#allocation9 + $0x70] sm:$0xff]
    %v2313 = vld [vmem:[#allocation9 + $0x78] sm:$0xff]
    %v2314 = vld [vmem:[#allocation9 + $0x80] sm:$0xff]
    %v2315 = vld [vmem:[#allocation9 + $0x88] sm:$0xff]
    %v2316 = vld [vmem:[#allocation9 + $0x90] sm:$0xff]
    %v2317 = vld [vmem:[#allocation9 + $0x98] sm:$0xff]
    %v2318 = vld [vmem:[#allocation9 + $0xa0] sm:$0xff]
    %v2319 = vld [vmem:[#allocation9 + $0xa8] sm:$0xff]
    %v2320 = vld [vmem:[#allocation9 + $0xb0] sm:$0xff]
    %v2321 = vld [vmem:[#allocation9 + $0xb8] sm:$0xff]
    %v2322 = vld [vmem:[#allocation9 + $0xc0] sm:$0xff]
    %v2323 = vld [vmem:[#allocation9 + $0xc8] sm:$0xff]
    %v2324 = vld [vmem:[#allocation9 + $0xd0] sm:$0xff]
    %v2325 = vld [vmem:[#allocation9 + $0xd8] sm:$0xff]
    %v2326 = vld [vmem:[#allocation9 + $0xe0] sm:$0xff]
    %v2327 = vld [vmem:[#allocation9 + $0xe8] sm:$0xff]
    %v2328 = vld [vmem:[#allocation9 + $0xf0] sm:$0xff]
    %v2329 = vld [vmem:[#allocation9 + $0xf8] sm:$0xff]
    %v2330 = vld [vmem:[#allocation9 + $0x100] sm:$0xff]
    %v2331 = vld [vmem:[#allocation9 + $0x108] sm:$0xff]
    %v2332 = vld [vmem:[#allocation9 + $0x110] sm:$0xff]
    %v2333 = vld [vmem:[#allocation9 + $0x118] sm:$0xff]
    %v2334 = vld [vmem:[#allocation9 + $0x120] sm:$0xff]
    %v2335 = vld [vmem:[#allocation9 + $0x128] sm:$0xff]
    %v2336 = vld [vmem:[#allocation9 + $0x130] sm:$0xff]
    %v2337 = vld [vmem:[#allocation9 + $0x138] sm:$0xff]
    %v2338 = vld [vmem:[#allocation9 + $0x140] sm:$0xff]
    %v2339 = vld [vmem:[#allocation9 + $0x148] sm:$0xff]
    %v2340 = vld [vmem:[#allocation9 + $0x150] sm:$0xff]
    %v2341 = vld [vmem:[#allocation9 + $0x158] sm:$0xff]
    %v2342 = vld [vmem:[#allocation9 + $0x160] sm:$0xff]
    %v2343 = vld [vmem:[#allocation9 + $0x168] sm:$0xff]
    %v2344 = vld [vmem:[#allocation9 + $0x170] sm:$0xff]
    %v2345 = vld [vmem:[#allocation9 + $0x178] sm:$0xff]
    %v2346 = vld [vmem:[#allocation9 + $0x180] sm:$0xff]
    %v2347 = vld [vmem:[#allocation9 + $0x188] sm:$0xff]
    %v2348 = vld [vmem:[#allocation9 + $0x190] sm:$0xff]
    %v2349 = vld [vmem:[#allocation9 + $0x198] sm:$0xff]
    %v2350 = vld [vmem:[#allocation9 + $0x1a0] sm:$0xff]
    %v2351 = vld [vmem:[#allocation9 + $0x1a8] sm:$0xff]
    %v2352 = vld [vmem:[#allocation9 + $0x1b0] sm:$0xff]
    %v2353 = vld [vmem:[#allocation9 + $0x1b8] sm:$0xff]
    %v2354 = vld [vmem:[#allocation9 + $0x1c0] sm:$0xff]
    %v2355 = vld [vmem:[#allocation9 + $0x1c8] sm:$0xff]
    %v2356 = vld [vmem:[#allocation9 + $0x1d0] sm:$0xff]
    %v2357 = vld [vmem:[#allocation9 + $0x1d8] sm:$0xff]
    %v2358 = vld [vmem:[#allocation9 + $0x1e0] sm:$0xff]
    %v2359 = vld [vmem:[#allocation9 + $0x1e8] sm:$0xff]
    %v2360 = vld [vmem:[#allocation9 + $0x1f0] sm:$0xff]
    %v2361 = vld [vmem:[#allocation9 + $0x1f8] sm:$0xff]
    %v2362 = vld [vmem:[#allocation9 + $0x200] sm:$0xff]
    %v2363 = vld [vmem:[#allocation9 + $0x208] sm:$0xff]
    %v2364 = vld [vmem:[#allocation9 + $0x210] sm:$0xff]
    %v2365 = vld [vmem:[#allocation9 + $0x218] sm:$0xff]
    %v2366 = vld [vmem:[#allocation9 + $0x220] sm:$0xff]
    %v2367 = vld [vmem:[#allocation9 + $0x228] sm:$0xff]
    %v2368 = vld [vmem:[#allocation9 + $0x230] sm:$0xff]
    %v2369 = vld [vmem:[#allocation9 + $0x238] sm:$0xff]
    %v2370 = vld [vmem:[#allocation9 + $0x240] sm:$0xff]
    %v2371 = vld [vmem:[#allocation9 + $0x248] sm:$0xff]
    %v2372 = vld [vmem:[#allocation9 + $0x250] sm:$0xff]
    %v2373 = vld [vmem:[#allocation9 + $0x258] sm:$0xff]
    %v2374 = vld [vmem:[#allocation9 + $0x260] sm:$0xff]
    %v2375 = vld [vmem:[#allocation9 + $0x268] sm:$0xff]
    %v2376 = vld [vmem:[#allocation9 + $0x270] sm:$0xff]
    %v2377 = vld [vmem:[#allocation9 + $0x278] sm:$0xff]
    %v2378 = vld [vmem:[#allocation9 + $0x280] sm:$0xff]
    %v2379 = vld [vmem:[#allocation9 + $0x288] sm:$0xff]
    %v2380 = vld [vmem:[#allocation9 + $0x290] sm:$0xff]
    %v2381 = vld [vmem:[#allocation9 + $0x298] sm:$0xff]
    %v2382 = vld [vmem:[#allocation9 + $0x2a0] sm:$0xff]
    %v2383 = vld [vmem:[#allocation9 + $0x2a8] sm:$0xff]
    %v2384 = vld [vmem:[#allocation9 + $0x2b0] sm:$0xff]
    %v2385 = vld [vmem:[#allocation9 + $0x2b8] sm:$0xff]
    %v2386 = vld [vmem:[#allocation9 + $0x2c0] sm:$0xff]
    %v2387 = vld [vmem:[#allocation9 + $0x2c8] sm:$0xff]
    %v2388 = vld [vmem:[#allocation9 + $0x2d0] sm:$0xff]
    %v2389 = vld [vmem:[#allocation9 + $0x2d8] sm:$0xff]
    %v2390 = vld [vmem:[#allocation9 + $0x2e0] sm:$0xff]
    %v2391 = vld [vmem:[#allocation9 + $0x2e8] sm:$0xff]
    %v2392 = vld [vmem:[#allocation9 + $0x2f0] sm:$0xff]
    %v2393 = vld [vmem:[#allocation9 + $0x2f8] sm:$0xff]
    %v2394 = vld [vmem:[#allocation11] sm:$0x3]
    %v2396 = vlaneseq
    %v2397 = vshrl.u32 %v2396, 7
    %v2398 = vsub.s32 0, %v2397
    %v2399 = vrot.slane %v2394, %v2398
    %v2400 = vlaneseq
    %v2401 = vshrl.u32 %v2400, 7
    %v2402 = vsub.s32 1, %v2401
    %v2403 = vrot.slane %v2394, %v2402
    %v2502 = vunpack.c.l.b16 %v2298
    %v2503 = vunpack.c.h.b16 %v2298
    %v2504 = vunpack.c.l.b16 %v2299
    %v2505 = vunpack.c.h.b16 %v2299
    %v2506 = vunpack.c.l.b16 %v2300
    %v2507 = vunpack.c.h.b16 %v2300
    %v2508 = vunpack.c.l.b16 %v2301
    %v2509 = vunpack.c.h.b16 %v2301
    %v2510 = vunpack.c.l.b16 %v2302
    %v2511 = vunpack.c.h.b16 %v2302
    %v2512 = vunpack.c.l.b16 %v2303
    %v2513 = vunpack.c.h.b16 %v2303
    %v2514 = vunpack.c.l.b16 %v2304
    %v2515 = vunpack.c.h.b16 %v2304
    %v2516 = vunpack.c.l.b16 %v2305
    %v2517 = vunpack.c.h.b16 %v2305
    %v2518 = vunpack.c.l.b16 %v2306
    %v2519 = vunpack.c.h.b16 %v2306
    %v2520 = vunpack.c.l.b16 %v2307
    %v2521 = vunpack.c.h.b16 %v2307
    %v2522 = vunpack.c.l.b16 %v2308
    %v2523 = vunpack.c.h.b16 %v2308
    %v2524 = vunpack.c.l.b16 %v2309
    %v2525 = vunpack.c.h.b16 %v2309
    %v2526 = vunpack.c.l.b16 %v2310
    %v2527 = vunpack.c.h.b16 %v2310
    %v2528 = vunpack.c.l.b16 %v2311
    %v2529 = vunpack.c.h.b16 %v2311
    %v2530 = vunpack.c.l.b16 %v2312
    %v2531 = vunpack.c.h.b16 %v2312
    %v2532 = vunpack.c.l.b16 %v2313
    %v2533 = vunpack.c.h.b16 %v2313
    %v2534 = vunpack.c.l.b16 %v2314
    %v2535 = vunpack.c.h.b16 %v2314
    %v2536 = vunpack.c.l.b16 %v2315
    %v2537 = vunpack.c.h.b16 %v2315
    %v2538 = vunpack.c.l.b16 %v2316
    %v2539 = vunpack.c.h.b16 %v2316
    %v2540 = vunpack.c.l.b16 %v2317
    %v2541 = vunpack.c.h.b16 %v2317
    %v2542 = vunpack.c.l.b16 %v2318
    %v2543 = vunpack.c.h.b16 %v2318
    %v2544 = vunpack.c.l.b16 %v2319
    %v2545 = vunpack.c.h.b16 %v2319
    %v2546 = vunpack.c.l.b16 %v2320
    %v2547 = vunpack.c.h.b16 %v2320
    %v2548 = vunpack.c.l.b16 %v2321
    %v2549 = vunpack.c.h.b16 %v2321
    %v2550 = vunpack.c.l.b16 %v2322
    %v2551 = vunpack.c.h.b16 %v2322
    %v2552 = vunpack.c.l.b16 %v2323
    %v2553 = vunpack.c.h.b16 %v2323
    %v2554 = vunpack.c.l.b16 %v2324
    %v2555 = vunpack.c.h.b16 %v2324
    %v2556 = vunpack.c.l.b16 %v2325
    %v2557 = vunpack.c.h.b16 %v2325
    %v2558 = vunpack.c.l.b16 %v2326
    %v2559 = vunpack.c.h.b16 %v2326
    %v2560 = vunpack.c.l.b16 %v2327
    %v2561 = vunpack.c.h.b16 %v2327
    %v2562 = vunpack.c.l.b16 %v2328
    %v2563 = vunpack.c.h.b16 %v2328
    %v2564 = vunpack.c.l.b16 %v2329
    %v2565 = vunpack.c.h.b16 %v2329
    %v2566 = vunpack.c.l.b16 %v2330
    %v2567 = vunpack.c.h.b16 %v2330
    %v2568 = vunpack.c.l.b16 %v2331
    %v2569 = vunpack.c.h.b16 %v2331
    %v2570 = vunpack.c.l.b16 %v2332
    %v2571 = vunpack.c.h.b16 %v2332
    %v2572 = vunpack.c.l.b16 %v2333
    %v2573 = vunpack.c.h.b16 %v2333
    %v2574 = vunpack.c.l.b16 %v2334
    %v2575 = vunpack.c.h.b16 %v2334
    %v2576 = vunpack.c.l.b16 %v2335
    %v2577 = vunpack.c.h.b16 %v2335
    %v2578 = vunpack.c.l.b16 %v2336
    %v2579 = vunpack.c.h.b16 %v2336
    %v2580 = vunpack.c.l.b16 %v2337
    %v2581 = vunpack.c.h.b16 %v2337
    %v2582 = vunpack.c.l.b16 %v2338
    %v2583 = vunpack.c.h.b16 %v2338
    %v2584 = vunpack.c.l.b16 %v2339
    %v2585 = vunpack.c.h.b16 %v2339
    %v2586 = vunpack.c.l.b16 %v2340
    %v2587 = vunpack.c.h.b16 %v2340
    %v2588 = vunpack.c.l.b16 %v2341
    %v2589 = vunpack.c.h.b16 %v2341
    %v2590 = vunpack.c.l.b16 %v2342
    %v2591 = vunpack.c.h.b16 %v2342
    %v2592 = vunpack.c.l.b16 %v2343
    %v2593 = vunpack.c.h.b16 %v2343
    %v2594 = vunpack.c.l.b16 %v2344
    %v2595 = vunpack.c.h.b16 %v2344
    %v2596 = vunpack.c.l.b16 %v2345
    %v2597 = vunpack.c.h.b16 %v2345
    %v2598 = vunpack.c.l.b16 %v2346
    %v2599 = vunpack.c.h.b16 %v2346
    %v2600 = vunpack.c.l.b16 %v2347
    %v2601 = vunpack.c.h.b16 %v2347
    %v2602 = vunpack.c.l.b16 %v2348
    %v2603 = vunpack.c.h.b16 %v2348
    %v2604 = vunpack.c.l.b16 %v2349
    %v2605 = vunpack.c.h.b16 %v2349
    %v2606 = vunpack.c.l.b16 %v2350
    %v2607 = vunpack.c.h.b16 %v2350
    %v2608 = vunpack.c.l.b16 %v2351
    %v2609 = vunpack.c.h.b16 %v2351
    %v2610 = vunpack.c.l.b16 %v2352
    %v2611 = vunpack.c.h.b16 %v2352
    %v2612 = vunpack.c.l.b16 %v2353
    %v2613 = vunpack.c.h.b16 %v2353
    %v2614 = vunpack.c.l.b16 %v2354
    %v2615 = vunpack.c.h.b16 %v2354
    %v2616 = vunpack.c.l.b16 %v2355
    %v2617 = vunpack.c.h.b16 %v2355
    %v2618 = vunpack.c.l.b16 %v2356
    %v2619 = vunpack.c.h.b16 %v2356
    %v2620 = vunpack.c.l.b16 %v2357
    %v2621 = vunpack.c.h.b16 %v2357
    %v2622 = vunpack.c.l.b16 %v2358
    %v2623 = vunpack.c.h.b16 %v2358
    %v2624 = vunpack.c.l.b16 %v2359
    %v2625 = vunpack.c.h.b16 %v2359
    %v2626 = vunpack.c.l.b16 %v2360
    %v2627 = vunpack.c.h.b16 %v2360
    %v2628 = vunpack.c.l.b16 %v2361
    %v2629 = vunpack.c.h.b16 %v2361
    %v2630 = vunpack.c.l.b16 %v2362
    %v2631 = vunpack.c.h.b16 %v2362
    %v2632 = vunpack.c.l.b16 %v2363
    %v2633 = vunpack.c.h.b16 %v2363
    %v2634 = vunpack.c.l.b16 %v2364
    %v2635 = vunpack.c.h.b16 %v2364
    %v2636 = vunpack.c.l.b16 %v2365
    %v2637 = vunpack.c.h.b16 %v2365
    %v2638 = vunpack.c.l.b16 %v2366
    %v2639 = vunpack.c.h.b16 %v2366
    %v2640 = vunpack.c.l.b16 %v2367
    %v2641 = vunpack.c.h.b16 %v2367
    %v2642 = vunpack.c.l.b16 %v2368
    %v2643 = vunpack.c.h.b16 %v2368
    %v2644 = vunpack.c.l.b16 %v2369
    %v2645 = vunpack.c.h.b16 %v2369
    %v2646 = vunpack.c.l.b16 %v2370
    %v2647 = vunpack.c.h.b16 %v2370
    %v2648 = vunpack.c.l.b16 %v2371
    %v2649 = vunpack.c.h.b16 %v2371
    %v2650 = vunpack.c.l.b16 %v2372
    %v2651 = vunpack.c.h.b16 %v2372
    %v2652 = vunpack.c.l.b16 %v2373
    %v2653 = vunpack.c.h.b16 %v2373
    %v2654 = vunpack.c.l.b16 %v2374
    %v2655 = vunpack.c.h.b16 %v2374
    %v2656 = vunpack.c.l.b16 %v2375
    %v2657 = vunpack.c.h.b16 %v2375
    %v2658 = vunpack.c.l.b16 %v2376
    %v2659 = vunpack.c.h.b16 %v2376
    %v2660 = vunpack.c.l.b16 %v2377
    %v2661 = vunpack.c.h.b16 %v2377
    %v2662 = vunpack.c.l.b16 %v2378
    %v2663 = vunpack.c.h.b16 %v2378
    %v2664 = vunpack.c.l.b16 %v2379
    %v2665 = vunpack.c.h.b16 %v2379
    %v2666 = vunpack.c.l.b16 %v2380
    %v2667 = vunpack.c.h.b16 %v2380
    %v2668 = vunpack.c.l.b16 %v2381
    %v2669 = vunpack.c.h.b16 %v2381
    %v2670 = vunpack.c.l.b16 %v2382
    %v2671 = vunpack.c.h.b16 %v2382
    %v2672 = vunpack.c.l.b16 %v2383
    %v2673 = vunpack.c.h.b16 %v2383
    %v2674 = vunpack.c.l.b16 %v2384
    %v2675 = vunpack.c.h.b16 %v2384
    %v2676 = vunpack.c.l.b16 %v2385
    %v2677 = vunpack.c.h.b16 %v2385
    %v2678 = vunpack.c.l.b16 %v2386
    %v2679 = vunpack.c.h.b16 %v2386
    %v2680 = vunpack.c.l.b16 %v2387
    %v2681 = vunpack.c.h.b16 %v2387
    %v2682 = vunpack.c.l.b16 %v2388
    %v2683 = vunpack.c.h.b16 %v2388
    %v2684 = vunpack.c.l.b16 %v2389
    %v2685 = vunpack.c.h.b16 %v2389
    %v2686 = vunpack.c.l.b16 %v2390
    %v2687 = vunpack.c.h.b16 %v2390
    %v2688 = vunpack.c.l.b16 %v2391
    %v2689 = vunpack.c.h.b16 %v2391
    %v2690 = vunpack.c.l.b16 %v2392
    %v2691 = vunpack.c.h.b16 %v2392
    %v2692 = vunpack.c.l.b16 %v2393
    %v2693 = vunpack.c.h.b16 %v2393
    %v2694 = vpack.c.b16 %v2504, %v2502
    %v2695 = vpack.c.b16 %v2505, %v2503
    %v2696 = vpack.c.b16 %v2508, %v2506
    %v2697 = vpack.c.b16 %v2509, %v2507
    %v2698 = vpack.c.b16 %v2512, %v2510
    %v2699 = vpack.c.b16 %v2513, %v2511
    %v2700 = vpack.c.b16 %v2516, %v2514
    %v2701 = vpack.c.b16 %v2517, %v2515
    %v2702 = vpack.c.b16 %v2520, %v2518
    %v2703 = vpack.c.b16 %v2521, %v2519
    %v2704 = vpack.c.b16 %v2524, %v2522
    %v2705 = vpack.c.b16 %v2525, %v2523
    %v2706 = vpack.c.b16 %v2528, %v2526
    %v2707 = vpack.c.b16 %v2529, %v2527
    %v2708 = vpack.c.b16 %v2532, %v2530
    %v2709 = vpack.c.b16 %v2533, %v2531
    %v2710 = vpack.c.b16 %v2536, %v2534
    %v2711 = vpack.c.b16 %v2537, %v2535
    %v2712 = vpack.c.b16 %v2540, %v2538
    %v2713 = vpack.c.b16 %v2541, %v2539
    %v2714 = vpack.c.b16 %v2544, %v2542
    %v2715 = vpack.c.b16 %v2545, %v2543
    %v2716 = vpack.c.b16 %v2548, %v2546
    %v2717 = vpack.c.b16 %v2549, %v2547
    %v2718 = vpack.c.b16 %v2552, %v2550
    %v2719 = vpack.c.b16 %v2553, %v2551
    %v2720 = vpack.c.b16 %v2556, %v2554
    %v2721 = vpack.c.b16 %v2557, %v2555
    %v2722 = vpack.c.b16 %v2560, %v2558
    %v2723 = vpack.c.b16 %v2561, %v2559
    %v2724 = vpack.c.b16 %v2564, %v2562
    %v2725 = vpack.c.b16 %v2565, %v2563
    %v2726 = vpack.c.b16 %v2568, %v2566
    %v2727 = vpack.c.b16 %v2569, %v2567
    %v2728 = vpack.c.b16 %v2572, %v2570
    %v2729 = vpack.c.b16 %v2573, %v2571
    %v2730 = vpack.c.b16 %v2576, %v2574
    %v2731 = vpack.c.b16 %v2577, %v2575
    %v2732 = vpack.c.b16 %v2580, %v2578
    %v2733 = vpack.c.b16 %v2581, %v2579
    %v2734 = vpack.c.b16 %v2584, %v2582
    %v2735 = vpack.c.b16 %v2585, %v2583
    %v2736 = vpack.c.b16 %v2588, %v2586
    %v2737 = vpack.c.b16 %v2589, %v2587
    %v2738 = vpack.c.b16 %v2592, %v2590
    %v2739 = vpack.c.b16 %v2593, %v2591
    %v2740 = vpack.c.b16 %v2596, %v2594
    %v2741 = vpack.c.b16 %v2597, %v2595
    %v2742 = vpack.c.b16 %v2600, %v2598
    %v2743 = vpack.c.b16 %v2601, %v2599
    %v2744 = vpack.c.b16 %v2604, %v2602
    %v2745 = vpack.c.b16 %v2605, %v2603
    %v2746 = vpack.c.b16 %v2608, %v2606
    %v2747 = vpack.c.b16 %v2609, %v2607
    %v2748 = vpack.c.b16 %v2612, %v2610
    %v2749 = vpack.c.b16 %v2613, %v2611
    %v2750 = vpack.c.b16 %v2616, %v2614
    %v2751 = vpack.c.b16 %v2617, %v2615
    %v2752 = vpack.c.b16 %v2620, %v2618
    %v2753 = vpack.c.b16 %v2621, %v2619
    %v2754 = vpack.c.b16 %v2624, %v2622
    %v2755 = vpack.c.b16 %v2625, %v2623
    %v2756 = vpack.c.b16 %v2628, %v2626
    %v2757 = vpack.c.b16 %v2629, %v2627
    %v2758 = vpack.c.b16 %v2632, %v2630
    %v2759 = vpack.c.b16 %v2633, %v2631
    %v2760 = vpack.c.b16 %v2636, %v2634
    %v2761 = vpack.c.b16 %v2637, %v2635
    %v2762 = vpack.c.b16 %v2640, %v2638
    %v2763 = vpack.c.b16 %v2641, %v2639
    %v2764 = vpack.c.b16 %v2644, %v2642
    %v2765 = vpack.c.b16 %v2645, %v2643
    %v2766 = vpack.c.b16 %v2648, %v2646
    %v2767 = vpack.c.b16 %v2649, %v2647
    %v2768 = vpack.c.b16 %v2652, %v2650
    %v2769 = vpack.c.b16 %v2653, %v2651
    %v2770 = vpack.c.b16 %v2656, %v2654
    %v2771 = vpack.c.b16 %v2657, %v2655
    %v2772 = vpack.c.b16 %v2660, %v2658
    %v2773 = vpack.c.b16 %v2661, %v2659
    %v2774 = vpack.c.b16 %v2664, %v2662
    %v2775 = vpack.c.b16 %v2665, %v2663
    %v2776 = vpack.c.b16 %v2668, %v2666
    %v2777 = vpack.c.b16 %v2669, %v2667
    %v2778 = vpack.c.b16 %v2672, %v2670
    %v2779 = vpack.c.b16 %v2673, %v2671
    %v2780 = vpack.c.b16 %v2676, %v2674
    %v2781 = vpack.c.b16 %v2677, %v2675
    %v2782 = vpack.c.b16 %v2680, %v2678
    %v2783 = vpack.c.b16 %v2681, %v2679
    %v2784 = vpack.c.b16 %v2684, %v2682
    %v2785 = vpack.c.b16 %v2685, %v2683
    %v2786 = vpack.c.b16 %v2688, %v2686
    %v2787 = vpack.c.b16 %v2689, %v2687
    %v2788 = vpack.c.b16 %v2692, %v2690
    %v2789 = vpack.c.b16 %v2693, %v2691
    %2886 = vmatprep.subr.bf16.mxu0 %v2695
    %2887 = vmatpush1.bf16.msra.mxu0 %v2694
    %2888 = vmatprep.subr.bf16.mxu0 %v2697
    %2889 = vmatpush1.bf16.msra.mxu0 %v2696
    %2890 = vmatprep.subr.bf16.mxu0 %v2699
    %2891 = vmatpush1.bf16.msra.mxu0 %v2698
    %2892 = vmatprep.subr.bf16.mxu0 %v2701
    %2893 = vmatpush1.bf16.msra.mxu0 %v2700
    %2894 = vmatprep.subr.bf16.mxu0 %v2703
    %2895 = vmatpush1.bf16.msra.mxu0 %v2702
    %2896 = vmatprep.subr.bf16.mxu0 %v2705
    %2897 = vmatpush1.bf16.msra.mxu0 %v2704
    %2898 = vmatprep.subr.bf16.mxu0 %v2707
    %2899 = vmatpush1.bf16.msra.mxu0 %v2706
    %2900 = vmatprep.subr.bf16.mxu0 %v2709
    %2901 = vmatpush1.bf16.msra.mxu0 %v2708
    %2902 = vmatprep.subr.bf16.mxu0 %v2711
    %2903 = vmatpush1.bf16.msra.mxu0 %v2710
    %2904 = vmatprep.subr.bf16.mxu0 %v2713
    %2905 = vmatpush1.bf16.msra.mxu0 %v2712
    %2906 = vmatprep.subr.bf16.mxu0 %v2715
    %2907 = vmatpush1.bf16.msra.mxu0 %v2714
    %2908 = vmatprep.subr.bf16.mxu0 %v2717
    %2909 = vmatpush1.bf16.msra.mxu0 %v2716
    %2910 = vmatprep.subr.bf16.mxu0 %v2719
    %2911 = vmatpush1.bf16.msra.mxu0 %v2718
    %2912 = vmatprep.subr.bf16.mxu0 %v2721
    %2913 = vmatpush1.bf16.msra.mxu0 %v2720
    %2914 = vmatprep.subr.bf16.mxu0 %v2723
    %2915 = vmatpush1.bf16.msra.mxu0 %v2722
    %2916 = vmatprep.subr.bf16.mxu0 %v2725
    %2917 = vmatpush1.bf16.msra.mxu0 %v2724
    %2918 = vmatprep.mubr.bf16.mxu0 %v2293
    %2919 = vmatmul.mubr.bf16.gmra.mrb[0].mxu0 %v2292
    %v2920 = vpop.f32.mrb[0].mxu0
    %v2921 = vadd.f32 %v2399, %v2920
    %v2922 = vpop.f32.mrb[0].mxu0
    %v2923 = vadd.f32 %v2403, %v2922
    %v2924 = vpop.f32.mrb[0].mxu0
    %v2925 = vpop.f32.mrb[0].mxu0
    %2926 = vdwg.mxu0
    %2927 = vmatprep.subr.bf16.mxu0 %v2727
    %2928 = vmatpush1.bf16.msra.mxu0 %v2726
    %2929 = vmatprep.subr.bf16.mxu0 %v2729
    %2930 = vmatpush1.bf16.msra.mxu0 %v2728
    %2931 = vmatprep.subr.bf16.mxu0 %v2731
    %2932 = vmatpush1.bf16.msra.mxu0 %v2730
    %2933 = vmatprep.subr.bf16.mxu0 %v2733
    %2934 = vmatpush1.bf16.msra.mxu0 %v2732
    %2935 = vmatprep.subr.bf16.mxu0 %v2735
    %2936 = vmatpush1.bf16.msra.mxu0 %v2734
    %2937 = vmatprep.subr.bf16.mxu0 %v2737
    %2938 = vmatpush1.bf16.msra.mxu0 %v2736
    %2939 = vmatprep.subr.bf16.mxu0 %v2739
    %2940 = vmatpush1.bf16.msra.mxu0 %v2738
    %2941 = vmatprep.subr.bf16.mxu0 %v2741
    %2942 = vmatpush1.bf16.msra.mxu0 %v2740
    %2943 = vmatprep.subr.bf16.mxu0 %v2743
    %2944 = vmatpush1.bf16.msra.mxu0 %v2742
    %2945 = vmatprep.subr.bf16.mxu0 %v2745
    %2946 = vmatpush1.bf16.msra.mxu0 %v2744
    %2947 = vmatprep.subr.bf16.mxu0 %v2747
    %2948 = vmatpush1.bf16.msra.mxu0 %v2746
    %2949 = vmatprep.subr.bf16.mxu0 %v2749
    %2950 = vmatpush1.bf16.msra.mxu0 %v2748
    %2951 = vmatprep.subr.bf16.mxu0 %v2751
    %2952 = vmatpush1.bf16.msra.mxu0 %v2750
    %2953 = vmatprep.subr.bf16.mxu0 %v2753
    %2954 = vmatpush1.bf16.msra.mxu0 %v2752
    %2955 = vmatprep.subr.bf16.mxu0 %v2755
    %2956 = vmatpush1.bf16.msra.mxu0 %v2754
    %2957 = vmatprep.subr.bf16.mxu0 %v2757
    %2958 = vmatpush1.bf16.msra.mxu0 %v2756
    %2959 = vmatprep.mubr.bf16.mxu0 %v2295
    %2960 = vmatmul.mubr.bf16.gmra.mrb[0].mxu0 %v2294
    %v2961 = vpop.f32.mrb[0].mxu0
    %v2962 = vadd.f32 %v2921, %v2961
    %v2963 = vpop.f32.mrb[0].mxu0
    %v2964 = vadd.f32 %v2923, %v2963
    %v2965 = vpop.f32.mrb[0].mxu0
    %v2966 = vpop.f32.mrb[0].mxu0
    %2967 = vdwg.mxu0
    %2968 = vmatprep.subr.bf16.mxu0 %v2759
    %2969 = vmatpush1.bf16.msra.mxu0 %v2758
    %2970 = vmatprep.subr.bf16.mxu0 %v2761
    %2971 = vmatpush1.bf16.msra.mxu0 %v2760
    %2972 = vmatprep.subr.bf16.mxu0 %v2763
    %2973 = vmatpush1.bf16.msra.mxu0 %v2762
    %2974 = vmatprep.subr.bf16.mxu0 %v2765
    %2975 = vmatpush1.bf16.msra.mxu0 %v2764
    %2976 = vmatprep.subr.bf16.mxu0 %v2767
    %2977 = vmatpush1.bf16.msra.mxu0 %v2766
    %2978 = vmatprep.subr.bf16.mxu0 %v2769
    %2979 = vmatpush1.bf16.msra.mxu0 %v2768
    %2980 = vmatprep.subr.bf16.mxu0 %v2771
    %2981 = vmatpush1.bf16.msra.mxu0 %v2770
    %2982 = vmatprep.subr.bf16.mxu0 %v2773
    %2983 = vmatpush1.bf16.msra.mxu0 %v2772
    %2984 = vmatprep.subr.bf16.mxu0 %v2775
    %2985 = vmatpush1.bf16.msra.mxu0 %v2774
    %2986 = vmatprep.subr.bf16.mxu0 %v2777
    %2987 = vmatpush1.bf16.msra.mxu0 %v2776
    %2988 = vmatprep.subr.bf16.mxu0 %v2779
    %2989 = vmatpush1.bf16.msra.mxu0 %v2778
    %2990 = vmatprep.subr.bf16.mxu0 %v2781
    %2991 = vmatpush1.bf16.msra.mxu0 %v2780
    %2992 = vmatprep.subr.bf16.mxu0 %v2783
    %2993 = vmatpush1.bf16.msra.mxu0 %v2782
    %2994 = vmatprep.subr.bf16.mxu0 %v2785
    %2995 = vmatpush1.bf16.msra.mxu0 %v2784
    %2996 = vmatprep.subr.bf16.mxu0 %v2787
    %2997 = vmatpush1.bf16.msra.mxu0 %v2786
    %2998 = vmatprep.subr.bf16.mxu0 %v2789
    %2999 = vmatpush1.bf16.msra.mxu0 %v2788
    %3000 = vmatprep.mubr.bf16.mxu0 %v2297
    %3001 = vmatmul.mubr.bf16.gmra.mrb[0].mxu0 %v2296
    %v3002 = vpop.f32.mrb[0].mxu0
    %v3003 = vadd.f32 %v2962, %v3002
    %v3004 = vpop.f32.mrb[0].mxu0
    %v3005 = vadd.f32 %v2964, %v3004
    %v3006 = vpop.f32.mrb[0].mxu0
    %v3007 = vpop.f32.mrb[0].mxu0
    %3008 = vdwg.mxu0
    %v3009 = vmax.f32 %v3003, 0.0
    %v3010 = vmax.f32 %v3005, 0.0
    %v3011 = vld [vmem:[#allocation12] sm:$0x3]
    %v3012 = vunpack.c.l.bf16 %v3011
    %v3014 = vlaneseq
    %v3015 = vshrl.u32 %v3014, 7
    %v3016 = vsub.s32 0, %v3015
    %v3017 = vrot.slane %v3012, %v3016
    %v3018 = vlaneseq
    %v3019 = vshrl.u32 %v3018, 7
    %v3020 = vsub.s32 2, %v3019
    %v3021 = vrot.slane %v3012, %v3020
    %v3024 = vlaneseq
    %v3025 = vshrl.u32 %v3024, 7
    %v3026 = vsub.s32 0, %v3025
    %v3027 = vrot.slane %v3017, %v3026
    %v3028 = vlaneseq
    %v3029 = vshrl.u32 %v3028, 7
    %v3030 = vsub.s32 0, %v3029
    %v3031 = vrot.slane %v3021, %v3030
    %v3032 = vmul.f32 %v3009, %v3027
    %v3033 = vmul.f32 %v3010, %v3031
    %vm3034 = vcmask 1041408
    %v3035 = vsel %vm3034, %v3032, 0.0
    %v3036 = vsel %vm3034, %v3033, 0.0
    %v3037 = vadd.f32 %v3035, %v3036
    %3038 = vadd.xlane.f32.xlu0 %v3037
    %v3039 = vpop.xlane.xlu0 %3038
    %s3040 = sld [smem:[#allocation2]]
    %v3041 = vstv %s3040
    %v3042 = vadd.f32 %v3039, %v3041
    %v3043 = vxor.u32 %v3042, 2147483648
    %v3044 = vmul.f32 %v3043, 1.442695
    %v3045 = vpow.pop %v3044
    %v3046 = vadd.f32 %v3045, 1.0
    %v3047 = vrcp.pop %v3046
    %v3048 = vmul.f32 1.0, %v3047
    %3049 = vst [vmem:[#allocation14] sm:$0x3] %v3048
    // Predicated region
    $region54: #{tpu_custom_call.1} parent=1 // pred_check
      _
    $region55: #{tpu_custom_call.1} parent=1 // pred_check_branch
      %3051 = sbr.rel (0) target = $region57
    $region56: #{tpu_custom_call.1} parent=1 // pred_region
      %s3053 = ssub.s32 32, 32
      %3054 = vsyncadd [#allocation5], %s3053
      %s3056 = sshll.u32 [#allocation14], 4
      %s3057 = int_to_ptr.vmem [resolvable:$true] %s3056
      %3059 = dma.vmem_to_hbm [thread:$0]  %s3057, 32, %s7, [#allocation5]
    $region57: #{tpu_custom_call.1} parent=1 // pred_fallthru
      _
    // Predicated region
    $region58: #{tpu_custom_call.1} parent=1 // pred_check
      _
    $region59: #{tpu_custom_call.1} parent=1 // pred_check_branch
      %3061 = sbr.rel (0) target = $region61
    $region60: #{tpu_custom_call.1} parent=1 // pred_region
      %3062 = dma.done [#allocation5], 32
    $region61: #{tpu_custom_call.1} parent=1 // pred_fallthru
      _
    %3063 = vsyncpa [#allocation4], 1
    %3064 = vsyncpa [#allocation7], 1
    %3065 = vsyncpa [#allocation10], 1
    %3066 = vsyncpa [#allocation13], 1
    %3067 = vsyncpa [#allocation5], 1

</llo_original>
